<compile_context>
chip_gen: v6e
topology: v6e:2x2x1
jax: 0.10.0
libtpu: 0.0.40
codegen_flags: <defaults>
</compile_context>

<pallas_src>
import math

import jax
import jax.numpy as jnp
from jax.experimental import pallas as pl
from jax.experimental.pallas import tpu as pltpu

LANE = 128


def _round_up(x, m):
    return (x + m - 1) // m * m


def _pad2(a, rows, cols):
    return jnp.pad(a, ((0, rows - a.shape[0]), (0, cols - a.shape[1])))


def _vmem_budget_bytes():
    """~80% of physical per-core VMEM as the Pallas buffer budget."""
    cap = None
    try:
        cap = int(getattr(pltpu.get_tpu_info(), "vmem_capacity_bytes", 0)) or None
    except Exception:
        cap = None
    if cap is None:
        try:
            kind = jax.devices()[0].device_kind.lower()
        except Exception:
            kind = ""
        cap = 64 * 1024 * 1024 if "v7" in kind else 128 * 1024 * 1024
    return int(cap * 0.8)


def _device_is_multicore():
    try:
        return "v7" in jax.devices()[0].device_kind.lower()
    except Exception:
        return False


# ----------------------------------------------------------------------------
# Fused 2-layer kernel.  grid = (phase, row tile):
#   phase 0 (tile i): H1[i] = relu( L[i] @ Z1 )       (Z1 precomputed or fused)
#   phase 1 (tile i): H2[i] = (L[i] @ H1) @ W2 + rowsum(L[i]) * b2
# H1 stays VMEM-resident in a bf16 scratch between the two phases.
# ----------------------------------------------------------------------------
def _make_fused_kernel(tm, fused_layer1, l_resident):

    def body(l_ref, lrow_ref, w2_ref, b2_ref, h1_ref, h2_ref, h1_acc, compute_h1):
        phase = pl.program_id(0)
        i = pl.program_id(1)
        row0 = pl.multiple_of(i * tm, tm)
        l_tile = l_ref[pl.ds(row0, tm), :] if l_resident else l_ref[...]
        lrow = lrow_ref[...]                       # (tm, 1) f32, exact row sums of L

        # H2's output block index is frozen at (0, 0) during phase 0 and never
        # written there; zero it once so any buffer flush is still defined.
        @pl.when((phase == 0) & (i == 0))
        def _init_h2():
            h2_ref[...] = jnp.zeros_like(h2_ref)

        @pl.when(phase == 0)
        def _layer1():
            h1 = jnp.maximum(compute_h1(l_tile, lrow), 0.0)        # f32 epilogue
            h1_acc[pl.ds(row0, tm), :] = h1.astype(h1_acc.dtype)   # bf16 scratch
            h1_ref[...] = h1.astype(h1_ref.dtype)                  # HBM tile (once)

        @pl.when(phase == 1)
        def _layer2():
            # (L@H1)@W2 + rowsum(L)*b2  ==  L@(H1@W2 + b2)
            lh = jnp.dot(l_tile, h1_acc[...], preferred_element_type=jnp.float32)
            h2 = jnp.dot(lh.astype(jnp.bfloat16), w2_ref[...],
                         preferred_element_type=jnp.float32)
            h2_ref[...] = (h2 + lrow * b2_ref[...]).astype(h2_ref.dtype)
            # NOTE: h1_ref is intentionally untouched in phase 1: its out_spec
            # index is frozen on the last phase-0 block, so the (still valid)
            # held buffer is what gets flushed at grid end.

    if fused_layer1:
        # layer-1 weights applied in-kernel: (L@X)@W1 + rowsum(L)*b1 == L@(X@W1+b1)
        def kernel(l_ref, lrow_ref, x_ref, w1_ref, b1_ref, w2_ref, b2_ref,
                   h1_ref, h2_ref, h1_acc):
            def compute_h1(l_tile, lrow):
                lx = jnp.dot(l_tile, x_ref[...], preferred_element_type=jnp.float32)
                h1 = jnp.dot(lx.astype(jnp.bfloat16), w1_ref[...],
                             preferred_element_type=jnp.float32)
                return h1 + lrow * b1_ref[...]
            body(l_ref, lrow_ref, w2_ref, b2_ref, h1_ref, h2_ref, h1_acc, compute_h1)
    else:
        # Z1 = X@W1 + b1 precomputed in the wrapper (bf16, lane-dense)
        def kernel(l_ref, lrow_ref, z1_ref, w2_ref, b2_ref,
                   h1_ref, h2_ref, h1_acc):
            def compute_h1(l_tile, lrow):
                return jnp.dot(l_tile, z1_ref[...], preferred_element_type=jnp.float32)
            body(l_ref, lrow_ref, w2_ref, b2_ref, h1_ref, h2_ref, h1_acc, compute_h1)

    return kernel


# ----------------------------------------------------------------------------
# Single "smoothing" layer kernel for the split (two-call, row-parallel) path:
#   out[i] = act( L[i] @ Z )      where Z already contains weights + bias.
# ----------------------------------------------------------------------------
def _make_smooth_kernel(tm, apply_relu, l_resident):
    def kernel(l_ref, z_ref, o_ref):
        i = pl.program_id(0)
        row0 = pl.multiple_of(i * tm, tm)
        l_tile = l_ref[pl.ds(row0, tm), :] if l_resident else l_ref[...]
        acc = jnp.dot(l_tile, z_ref[...], preferred_element_type=jnp.float32)
        if apply_relu:
            acc = jnp.maximum(acc, 0.0)
        o_ref[...] = acc.astype(o_ref.dtype)
    return kernel


def _smooth(Lp, Z, n_rows, tm, apply_relu, out_dtype, budget, l_resident=None):
    """Returns act(L @ Z)[:n_rows] for padded bf16 Lp and un-padded f32 Z."""
    n_pad = Lp.shape[0]
    n_tiles = n_pad // tm
    c = Z.shape[1]
    c_p = _round_up(c, LANE)
    Zp = _pad2(Z, n_pad, c_p).astype(jnp.bfloat16)
    out_bytes = jnp.dtype(out_dtype).itemsize

    fixed = 2 * n_pad * c_p * 2 + 2 * tm * c_p * out_bytes
    if l_resident is None:
        l_resident = fixed + 2 * n_pad * n_pad * 2 <= budget
    l_spec = (pl.BlockSpec((n_pad, n_pad), lambda i: (0, 0)) if l_resident
              else pl.BlockSpec((tm, n_pad), lambda i: (i, 0)))

    out = pl.pallas_call(
        _make_smooth_kernel(tm, apply_relu, l_resident),
        out_shape=jax.ShapeDtypeStruct((n_pad, c_p), out_dtype),
        grid_spec=pltpu.PrefetchScalarGridSpec(
            num_scalar_prefetch=0,
            grid=(n_tiles,),
            in_specs=[l_spec,
                      pl.BlockSpec((n_pad, c_p), lambda i: (0, 0))],
            out_specs=pl.BlockSpec((tm, c_p), lambda i: (i, 0)),
        ),
        compiler_params=pltpu.CompilerParams(
            dimension_semantics=("parallel",),   # independent row tiles -> both TCs
            vmem_limit_bytes=int(budget),
        ),
        cost_estimate=pl.CostEstimate(
            flops=int(2 * n_pad * n_pad * c_p), transcendentals=0,
            bytes_accessed=int(n_pad * n_pad * 2 + n_pad * c_p * 2
                               + n_pad * c_p * out_bytes)),
    )(Lp, Zp)
    return out[:n_rows, :c]


# ----------------------------------------------------------------------------
# GCNS forward (use_bn=False, eval mode -> dropout identity)
# ----------------------------------------------------------------------------
def gcns_forward(X, L, params, *, row_tile=None, precompute_z1=None,
                 l_resident=None, split_layers=None):
    """Returns [H1, H2] exactly as the PyTorch module's forward does."""
    N, c_in = X.shape
    c_hid = params["W1"].shape[1]
    c_out = params["W2"].shape[1]
    out_dtype = X.dtype
    out_bytes = jnp.dtype(out_dtype).itemsize

    cin_p = _round_up(c_in, LANE)
    chid_p = _round_up(c_hid, LANE)
    cout_p = _round_up(c_out, LANE)

    budget = _vmem_budget_bytes()

    # Row tiling: multiple of 16 (bf16 sublane packing), 128-aligned at scale.
    if row_tile is None:
        row_tile = 512 if budget >= 64 * 1024 * 1024 else 256
    tm = _round_up(max(16, min(row_tile, _round_up(N, 16))), 16)
    if N > 256:
        tm = _round_up(tm, 128)
    n_pad = _round_up(N, tm)
    n_tiles = n_pad // tm

    # Layer-1 ordering: contract the N^2 matmul over min(cin_p, chid_p).
    if precompute_z1 is None:
        precompute_z1 = cin_p > chid_p
    z_cols = chid_p if precompute_z1 else cin_p

    Xf = X.astype(jnp.float32)
    W1f = params["W1"].astype(jnp.float32)
    b1f = params["b1"].astype(jnp.float32).reshape(1, -1)
    W2f = params["W2"].astype(jnp.float32)
    b2f = params["b2"].astype(jnp.float32).reshape(1, -1)

    # Padding is exact: extra rows/cols are zero and contribute nothing.
    Lp = _pad2(L, n_pad, n_pad).astype(jnp.bfloat16)
    lrow = _pad2(jnp.sum(L, axis=1, keepdims=True).astype(jnp.float32), n_pad, 1)

    # Fused-call VMEM footprint (default double buffering on every operand).
    fused_fixed = (2 * n_pad * z_cols * 2          # Z1 / X (bf16, resident)
                   + 2 * chid_p * cout_p * 2       # W2
                   + 2 * 8 * cout_p * 4            # b2 (sublane padded)
                   + 2 * tm * LANE * 4             # lrow tile (lane padded)
                   + n_pad * chid_p * 2            # H1 scratch (bf16, single buffer)
                   + 2 * tm * chid_p * out_bytes   # H1 out tile
                   + 2 * tm * cout_p * out_bytes)  # H2 out tile
    if not precompute_z1:
        fused_fixed += 2 * cin_p * chid_p * 2 + 2 * 8 * chid_p * 4   # W1, b1
    l_res_bytes = 2 * n_pad * n_pad * 2
    l_stream_bytes = 2 * tm * n_pad * 2

    if split_layers is None:
        # v7x: 2 TensorCores/chip but only 64 MiB VMEM each; two row-parallel
        # calls use both cores. Also fall back if the fused set can't fit VMEM.
        split_layers = _device_is_multicore() or (fused_fixed + l_stream_bytes > budget)

    if split_layers:
        Z1 = Xf @ W1f + b1f
        H1 = _smooth(Lp, Z1, N, tm, True, out_dtype, budget, l_resident)
        Z2 = H1.astype(jnp.float32) @ W2f + b2f
        H2 = _smooth(Lp, Z2, N, tm, False, out_dtype, budget, l_resident)
        return [H1, H2]

    if l_resident is None:
        l_resident = fused_fixed + l_res_bytes <= budget
    vmem_needed = fused_fixed + (l_res_bytes if l_resident else l_stream_bytes)
    if vmem_needed > budget:
        raise ValueError(
            f"fused GCNS kernel needs ~{vmem_needed >> 20} MiB VMEM "
            f"(budget {budget >> 20} MiB); use split_layers=True or a smaller row_tile")

    if precompute_z1:
        Zp = _pad2(Xf @ W1f + b1f, n_pad, chid_p).astype(jnp.bfloat16)
    else:
        Zp = _pad2(Xf, n_pad, cin_p).astype(jnp.bfloat16)
    W2p = _pad2(W2f, chid_p, cout_p).astype(jnp.bfloat16)
    b2p = _pad2(b2f, 1, cout_p)                                   # f32 epilogue

    l_spec = (pl.BlockSpec((n_pad, n_pad), lambda p, i: (0, 0)) if l_resident
              else pl.BlockSpec((tm, n_pad), lambda p, i: (i, 0)))
    in_specs = [l_spec,
                pl.BlockSpec((tm, 1), lambda p, i: (i, 0)),       # rowsum(L) tile
                pl.BlockSpec((n_pad, z_cols), lambda p, i: (0, 0))]
    operands = [Lp, lrow, Zp]
    if not precompute_z1:
        W1p = _pad2(W1f, cin_p, chid_p).astype(jnp.bfloat16)
        b1p = _pad2(b1f, 1, chid_p)
        in_specs += [pl.BlockSpec((cin_p, chid_p), lambda p, i: (0, 0)),
                     pl.BlockSpec((1, chid_p), lambda p, i: (0, 0))]
        operands += [W1p, b1p]
    in_specs += [pl.BlockSpec((chid_p, cout_p), lambda p, i: (0, 0)),
                 pl.BlockSpec((1, cout_p), lambda p, i: (0, 0))]
    operands += [W2p, b2p]

    out_specs = (
        # H1: written in phase 0; index frozen on the last phase-0 block during
        # phase 1 (no redundant scratch copy / HBM writeback).
        pl.BlockSpec((tm, chid_p), lambda p, i: ((1 - p) * i + p * (n_tiles - 1), 0)),
        # H2: written in phase 1; index frozen at block 0 during phase 0.
        pl.BlockSpec((tm, cout_p), lambda p, i: (p * i, 0)),
    )

    flops = 2 * n_pad * n_pad * (z_cols + chid_p) + 2 * n_pad * chid_p * cout_p
    if not precompute_z1:
        flops += 2 * n_pad * cin_p * chid_p
    bytes_accessed = ((1 if l_resident else 2) * n_pad * n_pad * 2
                      + n_pad * z_cols * 2 + chid_p * cout_p * 2
                      + n_pad * 4 + cout_p * 4
                      + n_pad * chid_p * out_bytes + n_pad * cout_p * out_bytes)

    h1_pad, h2_pad = pl.pallas_call(
        _make_fused_kernel(tm, fused_layer1=not precompute_z1, l_resident=l_resident),
        out_shape=(jax.ShapeDtypeStruct((n_pad, chid_p), out_dtype),
                   jax.ShapeDtypeStruct((n_pad, cout_p), out_dtype)),
        grid_spec=pltpu.PrefetchScalarGridSpec(
            num_scalar_prefetch=0,
            grid=(2, n_tiles),                                    # (phase, row tile)
            in_specs=in_specs,
            out_specs=out_specs,
            scratch_shapes=[pltpu.VMEM((n_pad, chid_p), jnp.bfloat16)],  # H1 resident
        ),
        compiler_params=pltpu.CompilerParams(
            # Phase 1 needs every phase-0 row tile through the shared scratch,
            # so both axes stay sequential on one core in the fused path.
            dimension_semantics=("arbitrary", "arbitrary"),
            vmem_limit_bytes=int(budget),
        ),
        cost_estimate=pl.CostEstimate(flops=int(flops), transcendentals=0,
                                      bytes_accessed=int(bytes_accessed)),
    )(*operands)

    return [h1_pad[:N, :c_hid], h2_pad[:N, :c_out]]


# ----------------------------------------------------------------------------
# Deterministic parameter init (mimics nn.Linear default init shapes/ranges)
# ----------------------------------------------------------------------------
def init_linear(key, c_in, c_out, dtype=jnp.float32):
    kw, kb = jax.random.split(key)
    bound = 1.0 / math.sqrt(c_in)
    # stored as (C_in, C_out) so the kernel computes X @ W directly (== X @ W_torch^T)
    W = jax.random.uniform(kw, (c_in, c_out), dtype, -bound, bound)
    b = jax.random.uniform(kb, (c_out,), dtype, -bound, bound)
    return W, b


def build_gcn_laplacian(num_v, edges, dtype=jnp.float32):
    """Dense L_gcn = D^{-1/2} (A + I) D^{-1/2} via one vectorized scatter."""
    e = jnp.asarray(edges, dtype=jnp.int32)
    src = jnp.concatenate([e[:, 0], e[:, 1]])
    dst = jnp.concatenate([e[:, 1], e[:, 0]])
    A = jnp.zeros((num_v, num_v), dtype).at[src, dst].set(1.0)
    A_hat = A + jnp.eye(num_v, dtype=dtype)
    d_inv_sqrt = 1.0 / jnp.sqrt(jnp.sum(A_hat, axis=1))
    return A_hat * d_inv_sqrt[:, None] * d_inv_sqrt[None, :]


if __name__ == "__main__":
    key = jax.random.PRNGKey(0)
    k_x, k_l1, k_l2 = jax.random.split(key, 3)

    N = 96
    C_in = 16
    C_hid = 32
    num_classes = 8

    # deterministic toy graph: ring + a few chords
    edges = [(i, (i + 1) % N) for i in range(N)] + [(i, (i + 5) % N) for i in range(0, N, 3)]
    L = build_gcn_laplacian(N, edges)

    X = jax.random.normal(k_x, (N, C_in), jnp.float32)
    W1, b1 = init_linear(k_l1, C_in, C_hid)
    W2, b2 = init_linear(k_l2, C_hid, num_classes)
    params = {"W1": W1, "b1": b1, "W2": W2, "b2": b2}

    # semantic reference in plain f32 JAX (kernel uses bf16 MXU operands with
    # f32 accumulation, hence the modest tolerance)
    ref1 = jnp.maximum(L @ (X @ W1 + b1), 0.0)
    ref2 = L @ (ref1 @ W2 + b2)

    # Exercise the auto path plus every code path (fused/precompute layer 1,
    # streamed/resident L, fused single call vs. split row-parallel calls).
    configs = [
        dict(),                                                                  # auto
        dict(row_tile=32, precompute_z1=True, l_resident=False, split_layers=False),
        dict(row_tile=32, precompute_z1=False, l_resident=True, split_layers=False),
        dict(row_tile=32, split_layers=True, l_resident=False),
        dict(split_layers=True),                                                 # resident smooth
    ]
    for cfg in configs:
        outs = gcns_forward(X, L, params, **cfg)
        outs = [jax.block_until_ready(o) for o in outs]
        assert outs[0].shape == (N, C_hid), cfg
        assert outs[1].shape == (N, num_classes), cfg
        assert jnp.allclose(outs[0], ref1, atol=3e-2, rtol=3e-2), cfg
        assert jnp.allclose(outs[1], ref2, atol=3e-2, rtol=3e-2), cfg

    print("KERNEL_OK")
</pallas_src>

<mosaic_0001>
module attributes {stable_mosaic.version = 11 : i64} {
  func.func @kernel(%arg0: i32, %arg1: i32, %arg2: memref<96x96xbf16, #tpu.memory_space<vmem>>, %arg3: memref<96x1xf32, #tpu.memory_space<vmem>>, %arg4: memref<96x128xbf16, #tpu.memory_space<vmem>>, %arg5: memref<128x128xbf16, #tpu.memory_space<vmem>>, %arg6: memref<1x128xf32, #tpu.memory_space<vmem>>, %arg7: memref<128x128xbf16, #tpu.memory_space<vmem>>, %arg8: memref<1x128xf32, #tpu.memory_space<vmem>>, %arg9: memref<96x128xf32, #tpu.memory_space<vmem>>, %arg10: memref<96x128xf32, #tpu.memory_space<vmem>>, %arg11: memref<96x128xbf16, #tpu.memory_space<vmem>>) attributes {dimension_semantics = [#tpu.dimension_semantics<arbitrary>, #tpu.dimension_semantics<arbitrary>], iteration_bounds = array<i64: 2, 1>, scalar_prefetch = 0 : i64, scratch_operands = 1 : i64, tpu.core_type = #tpu.core_type<tc>, window_params = [{pipeline_mode = #tpu.pipeline_mode<synchronous>, transform_indices = @transform_0, window_bounds = array<i64: 96, 96>}, {transform_indices = @transform_1, window_bounds = array<i64: 96, 1>}, {pipeline_mode = #tpu.pipeline_mode<synchronous>, transform_indices = @transform_2, window_bounds = array<i64: 96, 128>}, {pipeline_mode = #tpu.pipeline_mode<synchronous>, transform_indices = @transform_3, window_bounds = array<i64: 128, 128>}, {pipeline_mode = #tpu.pipeline_mode<synchronous>, transform_indices = @transform_4, window_bounds = array<i64: 1, 128>}, {pipeline_mode = #tpu.pipeline_mode<synchronous>, transform_indices = @transform_5, window_bounds = array<i64: 128, 128>}, {pipeline_mode = #tpu.pipeline_mode<synchronous>, transform_indices = @transform_6, window_bounds = array<i64: 1, 128>}, {transform_indices = @transform_7, window_bounds = array<i64: 96, 128>}, {transform_indices = @transform_8, window_bounds = array<i64: 96, 128>}]} {
    %c96_i32 = arith.constant 96 : i32
    %0 = arith.muli %arg1, %c96_i32 : i32
    %1 = tpu.assume_multiple %0, 96 : i32
    %2 = arith.index_cast %1 : i32 to index
    %c0 = arith.constant 0 : index
    %3 = vector.load %arg2[%2, %c0] : memref<96x96xbf16, #tpu.memory_space<vmem>>, vector<96x96xbf16>
    %c0_0 = arith.constant 0 : index
    %c0_1 = arith.constant 0 : index
    %4 = vector.load %arg3[%c0_0, %c0_1] : memref<96x1xf32, #tpu.memory_space<vmem>>, vector<96x1xf32>
    %c0_i32 = arith.constant 0 : i32
    %5 = arith.cmpi eq, %arg0, %c0_i32 : i32
    %c0_i32_2 = arith.constant 0 : i32
    %6 = arith.cmpi eq, %arg1, %c0_i32_2 : i32
    %7 = arith.andi %5, %6 : i1
    %8 = arith.extui %7 : i1 to i32
    %c0_i32_3 = arith.constant 0 : i32
    %9 = arith.cmpi ne, %8, %c0_i32_3 : i32
    scf.if %9 {
      %cst = arith.constant 0.000000e+00 : f32
      %16 = vector.broadcast %cst : f32 to vector<96x128xf32>
      %c0_7 = arith.constant 0 : index
      %c0_8 = arith.constant 0 : index
      %17 = vector.load %arg10[%c0_7, %c0_8] : memref<96x128xf32, #tpu.memory_space<vmem>>, vector<96x128xf32>
      tpu.vector_store %arg10[%c0_7, %c0_8], %16 {strides = array<i32>} : memref<96x128xf32, #tpu.memory_space<vmem>>, vector<96x128xf32>,
    } else {
    }
    %c0_i32_4 = arith.constant 0 : i32
    %10 = arith.cmpi eq, %arg0, %c0_i32_4 : i32
    %11 = arith.extui %10 : i1 to i32
    %c0_i32_5 = arith.constant 0 : i32
    %12 = arith.cmpi ne, %11, %c0_i32_5 : i32
    scf.if %12 {
      %c0_7 = arith.constant 0 : index
      %c0_8 = arith.constant 0 : index
      %16 = vector.load %arg4[%c0_7, %c0_8] : memref<96x128xbf16, #tpu.memory_space<vmem>>, vector<96x128xbf16>
      %cst = arith.constant dense<0.000000e+00> : vector<96x128xf32>
      %17 = tpu.matmul %3, %16, %cst {dimension_numbers = #tpu.dot_dimension_numbers<[1], [0], [0], [1], [0, 0, 1, 1], [], []>} : vector<96x96xbf16>, vector<96x128xbf16>, vector<96x128xf32> -> vector<96x128xf32>
      %18 = arith.truncf %17 : vector<96x128xf32> to vector<96x128xbf16>
      %c0_9 = arith.constant 0 : index
      %c0_10 = arith.constant 0 : index
      %19 = vector.load %arg5[%c0_9, %c0_10] : memref<128x128xbf16, #tpu.memory_space<vmem>>, vector<128x128xbf16>
      %cst_11 = arith.constant dense<0.000000e+00> : vector<96x128xf32>
      %20 = tpu.matmul %18, %19, %cst_11 {dimension_numbers = #tpu.dot_dimension_numbers<[1], [0], [0], [1], [0, 0, 1, 1], [], []>} : vector<96x128xbf16>, vector<128x128xbf16>, vector<96x128xf32> -> vector<96x128xf32>
      %c0_12 = arith.constant 0 : index
      %c0_13 = arith.constant 0 : index
      %21 = vector.load %arg6[%c0_12, %c0_13] : memref<1x128xf32, #tpu.memory_space<vmem>>, vector<1x128xf32>
      %22 = vector.broadcast %4 : vector<96x1xf32> to vector<96x128xf32>
      %23 = vector.broadcast %21 : vector<1x128xf32> to vector<96x128xf32>
      %24 = arith.mulf %22, %23 : vector<96x128xf32>
      %25 = arith.addf %20, %24 : vector<96x128xf32>
      %cst_14 = arith.constant 0.000000e+00 : f32
      %26 = vector.broadcast %cst_14 : f32 to vector<96x128xf32>
      %27 = arith.maximumf %25, %26 : vector<96x128xf32>
      %28 = arith.truncf %27 : vector<96x128xf32> to vector<96x128xbf16>
      %29 = arith.index_cast %1 : i32 to index
      %c0_15 = arith.constant 0 : index
      %30 = vector.load %arg11[%29, %c0_15] : memref<96x128xbf16, #tpu.memory_space<vmem>>, vector<96x128xbf16>
      tpu.vector_store %arg11[%29, %c0_15], %28 {strides = array<i32>} : memref<96x128xbf16, #tpu.memory_space<vmem>>, vector<96x128xbf16>,
      %c0_16 = arith.constant 0 : index
      %c0_17 = arith.constant 0 : index
      %31 = vector.load %arg9[%c0_16, %c0_17] : memref<96x128xf32, #tpu.memory_space<vmem>>, vector<96x128xf32>
      tpu.vector_store %arg9[%c0_16, %c0_17], %27 {strides = array<i32>} : memref<96x128xf32, #tpu.memory_space<vmem>>, vector<96x128xf32>,
    } else {
    }
    %c1_i32 = arith.constant 1 : i32
    %13 = arith.cmpi eq, %arg0, %c1_i32 : i32
    %14 = arith.extui %13 : i1 to i32
    %c0_i32_6 = arith.constant 0 : i32
    %15 = arith.cmpi ne, %14, %c0_i32_6 : i32
    scf.if %15 {
      %c0_7 = arith.constant 0 : index
      %c0_8 = arith.constant 0 : index
      %16 = vector.load %arg11[%c0_7, %c0_8] : memref<96x128xbf16, #tpu.memory_space<vmem>>, vector<96x128xbf16>
      %cst = arith.constant dense<0.000000e+00> : vector<96x128xf32>
      %17 = tpu.matmul %3, %16, %cst {dimension_numbers = #tpu.dot_dimension_numbers<[1], [0], [0], [1], [0, 0, 1, 1], [], []>} : vector<96x96xbf16>, vector<96x128xbf16>, vector<96x128xf32> -> vector<96x128xf32>
      %18 = arith.truncf %17 : vector<96x128xf32> to vector<96x128xbf16>
      %c0_9 = arith.constant 0 : index
      %c0_10 = arith.constant 0 : index
      %19 = vector.load %arg7[%c0_9, %c0_10] : memref<128x128xbf16, #tpu.memory_space<vmem>>, vector<128x128xbf16>
      %cst_11 = arith.constant dense<0.000000e+00> : vector<96x128xf32>
      %20 = tpu.matmul %18, %19, %cst_11 {dimension_numbers = #tpu.dot_dimension_numbers<[1], [0], [0], [1], [0, 0, 1, 1], [], []>} : vector<96x128xbf16>, vector<128x128xbf16>, vector<96x128xf32> -> vector<96x128xf32>
      %c0_12 = arith.constant 0 : index
      %c0_13 = arith.constant 0 : index
      %21 = vector.load %arg8[%c0_12, %c0_13] : memref<1x128xf32, #tpu.memory_space<vmem>>, vector<1x128xf32>
      %22 = vector.broadcast %4 : vector<96x1xf32> to vector<96x128xf32>
      %23 = vector.broadcast %21 : vector<1x128xf32> to vector<96x128xf32>
      %24 = arith.mulf %22, %23 : vector<96x128xf32>
      %25 = arith.addf %20, %24 : vector<96x128xf32>
      %c0_14 = arith.constant 0 : index
      %c0_15 = arith.constant 0 : index
      %26 = vector.load %arg10[%c0_14, %c0_15] : memref<96x128xf32, #tpu.memory_space<vmem>>, vector<96x128xf32>
      tpu.vector_store %arg10[%c0_14, %c0_15], %25 {strides = array<i32>} : memref<96x128xf32, #tpu.memory_space<vmem>>, vector<96x128xf32>,
    } else {
    }
    return
  }
  func.func @transform_0(%arg0: i32, %arg1: i32) -> (i32, i32) {
    %c0_i32 = arith.constant 0 : i32
    %c0_i32_0 = arith.constant 0 : i32
    %c0_i32_1 = arith.constant 0 : i32
    return %c0_i32, %c0_i32_0 : i32, i32
  }
  func.func @transform_1(%arg0: i32, %arg1: i32) -> (i32, i32) {
    %c0_i32 = arith.constant 0 : i32
    %c0_i32_0 = arith.constant 0 : i32
    return %arg1, %c0_i32 : i32, i32
  }
  func.func @transform_2(%arg0: i32, %arg1: i32) -> (i32, i32) {
    %c0_i32 = arith.constant 0 : i32
    %c0_i32_0 = arith.constant 0 : i32
    %c0_i32_1 = arith.constant 0 : i32
    return %c0_i32, %c0_i32_0 : i32, i32
  }
  func.func @transform_3(%arg0: i32, %arg1: i32) -> (i32, i32) {
    %c0_i32 = arith.constant 0 : i32
    %c0_i32_0 = arith.constant 0 : i32
    %c0_i32_1 = arith.constant 0 : i32
    return %c0_i32, %c0_i32_0 : i32, i32
  }
  func.func @transform_4(%arg0: i32, %arg1: i32) -> (i32, i32) {
    %c0_i32 = arith.constant 0 : i32
    %c0_i32_0 = arith.constant 0 : i32
    %c0_i32_1 = arith.constant 0 : i32
    return %c0_i32, %c0_i32_0 : i32, i32
  }
  func.func @transform_5(%arg0: i32, %arg1: i32) -> (i32, i32) {
    %c0_i32 = arith.constant 0 : i32
    %c0_i32_0 = arith.constant 0 : i32
    %c0_i32_1 = arith.constant 0 : i32
    return %c0_i32, %c0_i32_0 : i32, i32
  }
  func.func @transform_6(%arg0: i32, %arg1: i32) -> (i32, i32) {
    %c0_i32 = arith.constant 0 : i32
    %c0_i32_0 = arith.constant 0 : i32
    %c0_i32_1 = arith.constant 0 : i32
    return %c0_i32, %c0_i32_0 : i32, i32
  }
  func.func @transform_7(%arg0: i32, %arg1: i32) -> (i32, i32) {
    %c1_i32 = arith.constant 1 : i32
    %0 = arith.subi %c1_i32, %arg0 : i32
    %1 = arith.muli %0, %arg1 : i32
    %c0_i32 = arith.constant 0 : i32
    %2 = arith.muli %arg0, %c0_i32 : i32
    %3 = arith.addi %1, %2 : i32
    %c0_i32_0 = arith.constant 0 : i32
    %c0_i32_1 = arith.constant 0 : i32
    return %3, %c0_i32_0 : i32, i32
  }
  func.func @transform_8(%arg0: i32, %arg1: i32) -> (i32, i32) {
    %0 = arith.muli %arg0, %arg1 : i32
    %c0_i32 = arith.constant 0 : i32
    %c0_i32_0 = arith.constant 0 : i32
    return %0, %c0_i32 : i32, i32
  }
}

</mosaic_0001>

<llo_original>
// kernel: tpu_custom_call.1
$region0: #{tpu_custom_call.1}
  #allocation0 [shape = 'u32[]', space=smem, size = 0x4, offset = 0x4, fixed_abs, tag = 'smem constant byte address 0x4 - core index']
  #allocation1 [shape = 'u32[144,128]{1,0:T(1,128)}', space=vmem, size = 0x12000, scoped, tag = 'internal scratch']
  #allocation2 [shape = 'bf16[96,128]{1,0:T(8,128)(2,1)}', space=vmem, size = 0x6000, scoped, tag = 'scratch operand']
  %s0 = inlined_call_operand.hbm [shape: bf16[96,96], index: 0, kind: input, shape index: {}]
  %s1 = inlined_call_operand.vmem [shape: f32[96,1], index: 1, kind: input, shape index: {}]
  %s2 = inlined_call_operand.hbm [shape: bf16[96,128], index: 2, kind: input, shape index: {}]
  %s3 = inlined_call_operand.vmem [shape: bf16[128,128], index: 3, kind: input, shape index: {}]
  %s4 = inlined_call_operand.vmem [shape: f32[1,128], index: 4, kind: input, shape index: {}]
  %s5 = inlined_call_operand.hbm [shape: bf16[128,128], index: 5, kind: input, shape index: {}]
  %s6 = inlined_call_operand.vmem [shape: f32[1,128], index: 6, kind: input, shape index: {}]
  %s7 = inlined_call_operand.hbm [shape: f32[96,128], index: 7, kind: output, shape index: {0}]
  %s8 = inlined_call_operand.hbm [shape: f32[96,128], index: 8, kind: output, shape index: {1}]
  %9 = xla_tuple %s7, %s8
  %s10 = sld [smem:[#allocation0]]
  $region93: #{tpu_custom_call.1} parent=0
    _
  %s12 = ssub.s32 1, %s10
  %s13 = scalar_select 0, %s12, %s10
  $region1: #{tpu_custom_call.1} parent=0
    #allocation3 [shape = 'u8[24576]{0}', space=vmem, size = 0x6000, scoped, tag = 'input window, operand 0, single buffered']
    #allocation4 [shape = 's32[2]{0}', space=sflag, size = 0x8, scoped, tag = 'scoped memory for tpu_custom_call.1']
    #allocation5 [shape = 's32[2]{0}', space=sflag, size = 0x8, scoped, tag = 'scoped memory for tpu_custom_call.1']
    #allocation6 [shape = 'u8[24576]{0}', space=vmem, size = 0x6000, scoped, tag = 'input window, operand 2, single buffered']
    #allocation7 [shape = 's32[1]{0}', space=sflag, size = 0x4, scoped, tag = 'scoped memory for tpu_custom_call.1']
    #allocation8 [shape = 'u8[32768]{0}', space=vmem, size = 0x8000, scoped, tag = 'input window, operand 5, single buffered']
    #allocation9 [shape = 'u8[98304]{0}', space=vmem, size = 0x18000, scoped, tag = 'output window, operand 0']
    #allocation10 [shape = 'u8[98304]{0}', space=vmem, size = 0x18000, scoped, tag = 'output window, operand 1']
    #allocation11 [shape = 's32[2]{0}', space=sflag, size = 0x8, scoped, tag = 'scoped memory for tpu_custom_call.1']
    %14 = vsyncpa [#allocation4], 0
    %15 = vsyncpa [#allocation7], 0
    %16 = vsyncpa [#allocation5], 0
    %s17 = scalar_lea.sflag [#allocation5], 1
    %18 = vsyncpa %s17, 0
    %19 = vsyncpa [#allocation11], 0
    %s20 = scalar_lea.sflag [#allocation11], 1
    %21 = vsyncpa %s20, 0
    loop: start=0, step=1, limit=4
    $region2: #{tpu_custom_call.1} parent=1 // loop_pre_header
      _
    $region3: #{tpu_custom_call.1} parent=1 // loop_header
      %s23 = sphi 0, %s27
      %p24 = scmp.ge.s32.totalorder %s23, 4
      %s30 = sphi 0, %s42
      %s31 = sphi 0, %s38
      %s32 = sphi 0, %s30
      %s33 = sphi 0, %s31
      %s34 = sphi 0, %s32
      %s35 = sphi 0, %s33
      %s43 = sphi 0, %s43
      %s45 = sphi 0, %s43
      %s46 = sphi 0, %s45
      %s60 = sphi 0, %s46
      %s66 = sphi 0, %s68
      %s69 = sphi 0, %s66
      %s70 = sphi 0, %s69
      %s86 = sphi 0, %s70
      %s90 = sphi 0, %s90
      %s92 = sphi 0, %s90
      %s93 = sphi 0, %s92
      %s107 = sphi 0, %s93
      %s111 = sphi 0, %s111
      %s113 = sphi 0, %s111
      %s114 = sphi 0, %s113
      %s128 = sphi 0, %s114
      %s132 = sphi 0, %s132
      %s134 = sphi 0, %s132
      %s135 = sphi 0, %s134
      %s149 = sphi 0, %s135
      %s153 = sphi 0, %s153
      %s155 = sphi 0, %s153
      %s156 = sphi 0, %s155
      %s170 = sphi 0, %s156
      %s174 = sphi 0, %s174
      %s176 = sphi 0, %s174
      %s177 = sphi 0, %s176
      %s191 = sphi 0, %s177
      %s201 = sphi 0, %s203
      %s204 = sphi 0, %s201
      %s205 = sphi 0, %s204
      %s221 = sphi 0, %s205
      %s229 = sphi 0, %s231
      %s232 = sphi 0, %s229
      %s233 = sphi 0, %s232
      %s249 = sphi 0, %s233
    $region4: #{tpu_custom_call.1} parent=1 // loop_header_branch
      %26 = sbr.rel (%p24) target = $region8
    $region5: #{tpu_custom_call.1} parent=1 // loop_body
      %s28 = ssub.s32 %s23, 1
      %s29 = ssub.s32 %s23, 2
      %s36 = sadd.s32 1, %s31
      %p37 = scmp.ge.s32.totalorder %s36, 1
      %s38 = scalar_select %p37, 0, %s36
      %s39 = sadd.s32 1, %s30
      %s40 = scalar_select %p37, %s39, %s30
      %p41 = scmp.ge.s32.totalorder %s40, 2
      %s42 = scalar_select %p41, 0, %s40
      %s44 = sadd.s32 %s43, 1
      %p47 = scmp.eq.s32.totalorder %s23, 1
      %p48 = scmp.ne.s32.totalorder %s43, %s45
      %p49 = scmp.eq.s32.totalorder %s23, 0
      %p50 = por %p48, %p49
      %p51 = scmp.ne.s32.totalorder %s43, %s45
      %p52 = scmp.eq.s32.totalorder %s28, 1
      %p53 = por %p51, %p52
      %p54 = scmp.ne.s32.totalorder %s45, %s46
      %p55 = scmp.eq.s32.totalorder %s28, 0
      %p56 = por %p54, %p55
      %p57 = scmp.ne.s32.totalorder %s45, %s46
      %p58 = scmp.eq.s32.totalorder %s29, 1
      %p59 = por %p57, %p58
      %p61 = scmp.ne.s32.totalorder %s46, %s60
      %p62 = scmp.eq.s32.totalorder %s29, 0
      %p63 = por %p61, %p62
      %s64 = ssub.s32 %s31, %s38
      %p65 = scmp.eq.s32.totalorder %s64, 0
      %s67 = sadd.s32 %s66, 1
      %s68 = scalar_select %p65, %s66, %s67
      %p71 = pneg %p65
      %p72 = scmp.eq.s32.totalorder %s23, 1
      %p73 = por %p71, %p72
      %p74 = scmp.ne.s32.totalorder %s66, %s69
      %p75 = scmp.eq.s32.totalorder %s23, 0
      %p76 = por %p74, %p75
      %p77 = scmp.ne.s32.totalorder %s66, %s69
      %p78 = scmp.eq.s32.totalorder %s28, 1
      %p79 = por %p77, %p78
      %p80 = scmp.ne.s32.totalorder %s69, %s70
      %p81 = scmp.eq.s32.totalorder %s28, 0
      %p82 = por %p80, %p81
      %p83 = scmp.ne.s32.totalorder %s69, %s70
      %p84 = scmp.eq.s32.totalorder %s29, 1
      %p85 = por %p83, %p84
      %p87 = scmp.ne.s32.totalorder %s70, %s86
      %p88 = scmp.eq.s32.totalorder %s29, 0
      %p89 = por %p87, %p88
      %s91 = sadd.s32 %s90, 1
      %p94 = scmp.eq.s32.totalorder %s23, 1
      %p95 = scmp.ne.s32.totalorder %s90, %s92
      %p96 = scmp.eq.s32.totalorder %s23, 0
      %p97 = por %p95, %p96
      %p98 = scmp.ne.s32.totalorder %s90, %s92
      %p99 = scmp.eq.s32.totalorder %s28, 1
      %p100 = por %p98, %p99
      %p101 = scmp.ne.s32.totalorder %s92, %s93
      %p102 = scmp.eq.s32.totalorder %s28, 0
      %p103 = por %p101, %p102
      %p104 = scmp.ne.s32.totalorder %s92, %s93
      %p105 = scmp.eq.s32.totalorder %s29, 1
      %p106 = por %p104, %p105
      %p108 = scmp.ne.s32.totalorder %s93, %s107
      %p109 = scmp.eq.s32.totalorder %s29, 0
      %p110 = por %p108, %p109
      %s112 = sadd.s32 %s111, 1
      %p115 = scmp.eq.s32.totalorder %s23, 1
      %p116 = scmp.ne.s32.totalorder %s111, %s113
      %p117 = scmp.eq.s32.totalorder %s23, 0
      %p118 = por %p116, %p117
      %p119 = scmp.ne.s32.totalorder %s111, %s113
      %p120 = scmp.eq.s32.totalorder %s28, 1
      %p121 = por %p119, %p120
      %p122 = scmp.ne.s32.totalorder %s113, %s114
      %p123 = scmp.eq.s32.totalorder %s28, 0
      %p124 = por %p122, %p123
      %p125 = scmp.ne.s32.totalorder %s113, %s114
      %p126 = scmp.eq.s32.totalorder %s29, 1
      %p127 = por %p125, %p126
      %p129 = scmp.ne.s32.totalorder %s114, %s128
      %p130 = scmp.eq.s32.totalorder %s29, 0
      %p131 = por %p129, %p130
      %s133 = sadd.s32 %s132, 1
      %p136 = scmp.eq.s32.totalorder %s23, 1
      %p137 = scmp.ne.s32.totalorder %s132, %s134
      %p138 = scmp.eq.s32.totalorder %s23, 0
      %p139 = por %p137, %p138
      %p140 = scmp.ne.s32.totalorder %s132, %s134
      %p141 = scmp.eq.s32.totalorder %s28, 1
      %p142 = por %p140, %p141
      %p143 = scmp.ne.s32.totalorder %s134, %s135
      %p144 = scmp.eq.s32.totalorder %s28, 0
      %p145 = por %p143, %p144
      %p146 = scmp.ne.s32.totalorder %s134, %s135
      %p147 = scmp.eq.s32.totalorder %s29, 1
      %p148 = por %p146, %p147
      %p150 = scmp.ne.s32.totalorder %s135, %s149
      %p151 = scmp.eq.s32.totalorder %s29, 0
      %p152 = por %p150, %p151
      %s154 = sadd.s32 %s153, 1
      %p157 = scmp.eq.s32.totalorder %s23, 1
      %p158 = scmp.ne.s32.totalorder %s153, %s155
      %p159 = scmp.eq.s32.totalorder %s23, 0
      %p160 = por %p158, %p159
      %p161 = scmp.ne.s32.totalorder %s153, %s155
      %p162 = scmp.eq.s32.totalorder %s28, 1
      %p163 = por %p161, %p162
      %p164 = scmp.ne.s32.totalorder %s155, %s156
      %p165 = scmp.eq.s32.totalorder %s28, 0
      %p166 = por %p164, %p165
      %p167 = scmp.ne.s32.totalorder %s155, %s156
      %p168 = scmp.eq.s32.totalorder %s29, 1
      %p169 = por %p167, %p168
      %p171 = scmp.ne.s32.totalorder %s156, %s170
      %p172 = scmp.eq.s32.totalorder %s29, 0
      %p173 = por %p171, %p172
      %s175 = sadd.s32 %s174, 1
      %p178 = scmp.eq.s32.totalorder %s23, 1
      %p179 = scmp.ne.s32.totalorder %s174, %s176
      %p180 = scmp.eq.s32.totalorder %s23, 0
      %p181 = por %p179, %p180
      %p182 = scmp.ne.s32.totalorder %s174, %s176
      %p183 = scmp.eq.s32.totalorder %s28, 1
      %p184 = por %p182, %p183
      %p185 = scmp.ne.s32.totalorder %s176, %s177
      %p186 = scmp.eq.s32.totalorder %s28, 0
      %p187 = por %p185, %p186
      %p188 = scmp.ne.s32.totalorder %s176, %s177
      %p189 = scmp.eq.s32.totalorder %s29, 1
      %p190 = por %p188, %p189
      %p192 = scmp.ne.s32.totalorder %s177, %s191
      %p193 = scmp.eq.s32.totalorder %s29, 0
      %p194 = por %p192, %p193
      %s195 = ssub.s32 1, %s30
      %s196 = smul.u32 %s195, %s31
      %s197 = ssub.s32 1, %s42
      %s198 = smul.u32 %s197, %s38
      %s199 = ssub.s32 %s196, %s198
      %p200 = scmp.eq.s32.totalorder %s199, 0
      %s202 = sadd.s32 %s201, 1
      %s203 = scalar_select %p200, %s201, %s202
      %p206 = pneg %p200
      %p207 = scmp.eq.s32.totalorder %s23, 1
      %p208 = por %p206, %p207
      %p209 = scmp.ne.s32.totalorder %s201, %s204
      %p210 = scmp.eq.s32.totalorder %s23, 0
      %p211 = por %p209, %p210
      %p212 = scmp.ne.s32.totalorder %s201, %s204
      %p213 = scmp.eq.s32.totalorder %s28, 1
      %p214 = por %p212, %p213
      %p215 = scmp.ne.s32.totalorder %s204, %s205
      %p216 = scmp.eq.s32.totalorder %s28, 0
      %p217 = por %p215, %p216
      %p218 = scmp.ne.s32.totalorder %s204, %s205
      %p219 = scmp.eq.s32.totalorder %s29, 1
      %p220 = por %p218, %p219
      %p222 = scmp.ne.s32.totalorder %s205, %s221
      %p223 = scmp.eq.s32.totalorder %s29, 0
      %p224 = por %p222, %p223
      %s225 = smul.u32 %s30, %s31
      %s226 = smul.u32 %s42, %s38
      %s227 = ssub.s32 %s225, %s226
      %p228 = scmp.eq.s32.totalorder %s227, 0
      %s230 = sadd.s32 %s229, 1
      %s231 = scalar_select %p228, %s229, %s230
      %p234 = pneg %p228
      %p235 = scmp.eq.s32.totalorder %s23, 1
      %p236 = por %p234, %p235
      %p237 = scmp.ne.s32.totalorder %s229, %s232
      %p238 = scmp.eq.s32.totalorder %s23, 0
      %p239 = por %p237, %p238
      %p240 = scmp.ne.s32.totalorder %s229, %s232
      %p241 = scmp.eq.s32.totalorder %s28, 1
      %p242 = por %p240, %p241
      %p243 = scmp.ne.s32.totalorder %s232, %s233
      %p244 = scmp.eq.s32.totalorder %s28, 0
      %p245 = por %p243, %p244
      %p246 = scmp.ne.s32.totalorder %s232, %s233
      %p247 = scmp.eq.s32.totalorder %s29, 1
      %p248 = por %p246, %p247
      %p250 = scmp.ne.s32.totalorder %s233, %s249
      %p251 = scmp.eq.s32.totalorder %s29, 0
      %p252 = por %p250, %p251
      %p253 = scmp.le.s32.totalorder 1, %s23
      %p254 = scmp.lt.s32.totalorder %s23, 3
      %p255 = pnand %p253, %p254
      %p256 = pneg %p255
      // Predicated region
      $region9: #{tpu_custom_call.1} parent=5 // pred_check
        _
      $region10: #{tpu_custom_call.1} parent=5 // pred_check_branch
        %258 = sbr.rel (%p255) target = $region12
      $region11: #{tpu_custom_call.1} parent=5 // pred_region
        %s259 = ssub.s32 %s23, 1
        // Predicated region
        $region13: #{tpu_custom_call.1} parent=11 // pred_check
          %p260 = pneg %p56
        $region14: #{tpu_custom_call.1} parent=11 // pred_check_branch
          %262 = sbr.rel (%p260) target = $region16
        $region15: #{tpu_custom_call.1} parent=11 // pred_region
          %s264 = ssub.s32 768, 768
          %265 = vsyncadd [#allocation4], %s264
          %s266 = sshll.u32 [#allocation3], 4
          %s267 = int_to_ptr.vmem [resolvable:$true] %s266
          %272 = dma.hbm_to_vmem [thread:$0]  %s0, 768, %s267, [#allocation4], 64, 64, 4
        $region16: #{tpu_custom_call.1} parent=11 // pred_fallthru
          _
        // Predicated region
        $region17: #{tpu_custom_call.1} parent=11 // pred_check
          %p273 = pneg %p82
        $region18: #{tpu_custom_call.1} parent=11 // pred_check_branch
          %275 = sbr.rel (%p273) target = $region20
        $region19: #{tpu_custom_call.1} parent=11 // pred_region
          %s276 = smul.u32 12, %s33
          %p277 = scmp.lt.s32.totalorder %s276, 11
          %s278 = scalar_select %p277, %s276, 11
          %s279 = smul.addr %s278, 8
          %s280 = scalar_lea.vmem %s1, %s279
          %s281 = smul.u32 12, %s33
        $region20: #{tpu_custom_call.1} parent=11 // pred_fallthru
          _
        // Predicated region
        $region21: #{tpu_custom_call.1} parent=11 // pred_check
          %p282 = pneg %p103
        $region22: #{tpu_custom_call.1} parent=11 // pred_check_branch
          %284 = sbr.rel (%p282) target = $region24
        $region23: #{tpu_custom_call.1} parent=11 // pred_region
          %s286 = ssub.s32 768, 768
          %287 = vsyncadd [#allocation7], %s286
          %s288 = sshll.u32 [#allocation6], 4
          %s289 = int_to_ptr.vmem [resolvable:$true] %s288
          %294 = dma.hbm_to_vmem [thread:$0]  %s2, 768, %s289, [#allocation7], 64, 64, 4
        $region24: #{tpu_custom_call.1} parent=11 // pred_fallthru
          _
        // Predicated region
        $region25: #{tpu_custom_call.1} parent=11 // pred_check
          %p295 = pneg %p124
        $region26: #{tpu_custom_call.1} parent=11 // pred_check_branch
          %297 = sbr.rel (%p295) target = $region28
        $region27: #{tpu_custom_call.1} parent=11 // pred_region
          _
        $region28: #{tpu_custom_call.1} parent=11 // pred_fallthru
          _
        // Predicated region
        $region29: #{tpu_custom_call.1} parent=11 // pred_check
          %p298 = pneg %p145
        $region30: #{tpu_custom_call.1} parent=11 // pred_check_branch
          %300 = sbr.rel (%p298) target = $region32
        $region31: #{tpu_custom_call.1} parent=11 // pred_region
          _
        $region32: #{tpu_custom_call.1} parent=11 // pred_fallthru
          _
        // Predicated region
        $region33: #{tpu_custom_call.1} parent=11 // pred_check
          %p301 = pneg %p166
        $region34: #{tpu_custom_call.1} parent=11 // pred_check_branch
          %303 = sbr.rel (%p301) target = $region36
        $region35: #{tpu_custom_call.1} parent=11 // pred_region
          %s305 = ssub.s32 1024, 1024
          %306 = vsyncadd [#allocation7], %s305
          %s307 = sshll.u32 [#allocation8], 4
          %s308 = int_to_ptr.vmem [resolvable:$true] %s307
          %313 = dma.hbm_to_vmem [thread:$0]  %s5, 1024, %s308, [#allocation7], 64, 64, 4
        $region36: #{tpu_custom_call.1} parent=11 // pred_fallthru
          _
        // Predicated region
        $region37: #{tpu_custom_call.1} parent=11 // pred_check
          %p314 = pneg %p187
        $region38: #{tpu_custom_call.1} parent=11 // pred_check_branch
          %316 = sbr.rel (%p314) target = $region40
        $region39: #{tpu_custom_call.1} parent=11 // pred_region
          _
        $region40: #{tpu_custom_call.1} parent=11 // pred_fallthru
          _
      $region12: #{tpu_custom_call.1} parent=5 // pred_fallthru
        _
      %p317 = scmp.lt.s32.totalorder %s23, 2
      // Predicated region
      $region41: #{tpu_custom_call.1} parent=5 // pred_check
        %p318 = pneg %p317
      $region42: #{tpu_custom_call.1} parent=5 // pred_check_branch
        %320 = sbr.rel (%p318) target = $region44
      $region43: #{tpu_custom_call.1} parent=5 // pred_region
        _
      $region44: #{tpu_custom_call.1} parent=5 // pred_fallthru
        _
      %p321 = scmp.le.s32.totalorder 1, %s23
      %p322 = scmp.lt.s32.totalorder %s23, 3
      %p323 = pnand %p321, %p322
      %p324 = pneg %p323
      // Predicated region
      $region45: #{tpu_custom_call.1} parent=5 // pred_check
        _
      $region46: #{tpu_custom_call.1} parent=5 // pred_check_branch
        %326 = sbr.rel (%p323) target = $region48
      $region47: #{tpu_custom_call.1} parent=5 // pred_region
        %s327 = ssub.s32 %s23, 1
        // Predicated region
        $region49: #{tpu_custom_call.1} parent=47 // pred_check
          %p328 = pneg %p56
        $region50: #{tpu_custom_call.1} parent=47 // pred_check_branch
          %330 = sbr.rel (%p328) target = $region52
        $region51: #{tpu_custom_call.1} parent=47 // pred_region
          %331 = dma.done [#allocation4], 768
        $region52: #{tpu_custom_call.1} parent=47 // pred_fallthru
          _
        // Predicated region
        $region53: #{tpu_custom_call.1} parent=47 // pred_check
          %p332 = pneg %p103
        $region54: #{tpu_custom_call.1} parent=47 // pred_check_branch
          %334 = sbr.rel (%p332) target = $region56
        $region55: #{tpu_custom_call.1} parent=47 // pred_region
          %335 = dma.done [#allocation7], 768
        $region56: #{tpu_custom_call.1} parent=47 // pred_fallthru
          _
        // Predicated region
        $region57: #{tpu_custom_call.1} parent=47 // pred_check
          %p336 = pneg %p166
        $region58: #{tpu_custom_call.1} parent=47 // pred_check_branch
          %338 = sbr.rel (%p336) target = $region60
        $region59: #{tpu_custom_call.1} parent=47 // pred_region
          %339 = dma.done [#allocation7], 1024
        $region60: #{tpu_custom_call.1} parent=47 // pred_fallthru
          _
        %p340 = pneg %p56
        %p341 = pneg %p53
        %s342 = smul.u32 12, %s33
        %p343 = scmp.lt.s32.totalorder %s342, 11
        %s344 = scalar_select %p343, %s342, 11
        %s345 = smul.addr %s344, 8
        %s346 = scalar_lea.vmem %s1, %s345
        %p347 = pneg %p82
        %p348 = pneg %p79
        %p349 = pneg %p103
        %p350 = pneg %p100
        %p351 = pneg %p124
        %p352 = pneg %p121
        %p353 = pneg %p145
        %p354 = pneg %p142
        %p355 = pneg %p166
        %p356 = pneg %p163
        %p357 = pneg %p187
        %p358 = pneg %p184
        %p359 = pneg %p217
        %p360 = pneg %p214
        %s361 = sand.u32 %s204, 1
        %s362 = scalar_lea.sflag [#allocation5], %s361
        %s363 = sand.u32 %s204, 1
        %s364 = smul.addr %s363, 96
        %s365 = scalar_lea.vmem [#allocation9], %s364
        %p366 = pneg %p245
        %p367 = pneg %p242
        %s368 = sand.u32 %s232, 1
        %s369 = scalar_lea.sflag [#allocation11], %s368
        %s370 = sand.u32 %s232, 1
        %s371 = smul.addr %s370, 96
        %s372 = scalar_lea.vmem [#allocation10], %s371
        %s373 = smul.u32 12, %s33
        %p374 = scmp.lt.s32.totalorder %s373, 11
        %s375 = scalar_select %p374, %s373, 11
        %s376 = smul.addr %s375, 8
        %s377 = scalar_lea.vmem %s1, %s376
        %s378 = smul.u32 12, %s33
        %s379 = ssub.s32 1, %s32
        %s380 = smul.u32 %s379, %s33
        %s381 = smul.u32 12, %s380
        %s382 = smul.u32 %s32, %s33
        %s383 = smul.u32 12, %s382
        %s385 = smul.u32 %s33, 96
        %s386 = sshra.s32 %s385, 3
        %s387 = sand.u32 %s385, 7
        %s388 = smul.addr %s386, 4
        %s389 = scalar_lea.vmem [#allocation3], %s388
        %v390 = vld [vmem:[%s389] sm:$0xf]
        %v391 = vld [vmem:[%s389 + $0x4] sm:$0xf]
        %v392 = vld [vmem:[%s389 + $0x8] sm:$0xf]
        %v393 = vld [vmem:[%s389 + $0xc] sm:$0xf]
        %v394 = vld [vmem:[%s389 + $0x10] sm:$0xf]
        %v395 = vld [vmem:[%s389 + $0x14] sm:$0xf]
        %v396 = vld [vmem:[%s389 + $0x18] sm:$0xf]
        %v397 = vld [vmem:[%s389 + $0x1c] sm:$0xf]
        %v398 = vld [vmem:[%s389 + $0x20] sm:$0xf]
        %v399 = vld [vmem:[%s389 + $0x24] sm:$0xf]
        %v400 = vld [vmem:[%s389 + $0x28] sm:$0xf]
        %v401 = vld [vmem:[%s389 + $0x2c] sm:$0xf]
        %v402 = vld [vmem:[%s377] sm:$0xff]
        %v403 = vld [vmem:[%s377 + $0x8] sm:$0xff]
        %v404 = vld [vmem:[%s377 + $0x10] sm:$0xff]
        %v405 = vld [vmem:[%s377 + $0x18] sm:$0xff]
        %v406 = vld [vmem:[%s377 + $0x20] sm:$0xff]
        %v407 = vld [vmem:[%s377 + $0x28] sm:$0xff]
        %v408 = vld [vmem:[%s377 + $0x30] sm:$0xff]
        %v409 = vld [vmem:[%s377 + $0x38] sm:$0xff]
        %v410 = vld [vmem:[%s377 + $0x40] sm:$0xff]
        %v411 = vld [vmem:[%s377 + $0x48] sm:$0xff]
        %v412 = vld [vmem:[%s377 + $0x50] sm:$0xff]
        %v413 = vld [vmem:[%s377 + $0x58] sm:$0xff]
        %p414 = scmp.eq.s32.totalorder %s32, 0
        %p415 = scmp.eq.s32.totalorder %s33, 0
        %p416 = pnand %p414, %p415
        %p417 = pneg %p416
        // Predicated region
        $region61: #{tpu_custom_call.1} parent=47 // pred_check
          _
        $region62: #{tpu_custom_call.1} parent=47 // pred_check_branch
          %419 = sbr.rel (%p416) target = $region64
        $region63: #{tpu_custom_call.1} parent=47 // pred_region
          %420 = vst [vmem:[%s372] sm:$0xff] 0.0
          %421 = vst [vmem:[%s372 + $0x8] sm:$0xff] 0.0
          %422 = vst [vmem:[%s372 + $0x10] sm:$0xff] 0.0
          %423 = vst [vmem:[%s372 + $0x18] sm:$0xff] 0.0
          %424 = vst [vmem:[%s372 + $0x20] sm:$0xff] 0.0
          %425 = vst [vmem:[%s372 + $0x28] sm:$0xff] 0.0
          %426 = vst [vmem:[%s372 + $0x30] sm:$0xff] 0.0
          %427 = vst [vmem:[%s372 + $0x38] sm:$0xff] 0.0
          %428 = vst [vmem:[%s372 + $0x40] sm:$0xff] 0.0
          %429 = vst [vmem:[%s372 + $0x48] sm:$0xff] 0.0
          %430 = vst [vmem:[%s372 + $0x50] sm:$0xff] 0.0
          %431 = vst [vmem:[%s372 + $0x58] sm:$0xff] 0.0
        $region64: #{tpu_custom_call.1} parent=47 // pred_fallthru
          _
        // Predicated region
        $region65: #{tpu_custom_call.1} parent=47 // pred_check
          %p432 = pneg %p414
        $region66: #{tpu_custom_call.1} parent=47 // pred_check_branch
          %434 = sbr.rel (%p432) target = $region68
        $region67: #{tpu_custom_call.1} parent=47 // pred_region
          %v435 = vld [vmem:[#allocation6] sm:$0xf]
          %v436 = vld [vmem:[#allocation6 + $0x4] sm:$0xf]
          %v437 = vld [vmem:[#allocation6 + $0x8] sm:$0xf]
          %v438 = vld [vmem:[#allocation6 + $0xc] sm:$0xf]
          %v439 = vld [vmem:[#allocation6 + $0x10] sm:$0xf]
          %v440 = vld [vmem:[#allocation6 + $0x14] sm:$0xf]
          %v441 = vld [vmem:[#allocation6 + $0x18] sm:$0xf]
          %v442 = vld [vmem:[#allocation6 + $0x1c] sm:$0xf]
          %v443 = vld [vmem:[#allocation6 + $0x20] sm:$0xf]
          %v444 = vld [vmem:[#allocation6 + $0x24] sm:$0xf]
          %v445 = vld [vmem:[#allocation6 + $0x28] sm:$0xf]
          %v446 = vld [vmem:[#allocation6 + $0x2c] sm:$0xf]
          %v459 = vunpack.c.l.b16 %v390
          %v460 = vunpack.c.l.b16 %v391
          %v461 = vunpack.c.l.b16 %v392
          %v462 = vunpack.c.l.b16 %v393
          %v463 = vunpack.c.l.b16 %v394
          %v464 = vunpack.c.l.b16 %v395
          %v465 = vunpack.c.l.b16 %v396
          %v466 = vunpack.c.l.b16 %v397
          %v467 = vunpack.c.l.b16 %v398
          %v468 = vunpack.c.l.b16 %v399
          %v469 = vunpack.c.l.b16 %v400
          %v470 = vunpack.c.l.b16 %v401
          %v471 = vpack.c.b16 %v460, %v459
          %v472 = vpack.c.b16 %v462, %v461
          %v473 = vpack.c.b16 %v464, %v463
          %v474 = vpack.c.b16 %v466, %v465
          %v475 = vpack.c.b16 %v468, %v467
          %v476 = vpack.c.b16 %v470, %v469
          %v489 = vunpack.c.l.b16 %v435
          %v490 = vunpack.c.l.b16 %v436
          %v491 = vunpack.c.l.b16 %v437
          %v492 = vunpack.c.l.b16 %v438
          %v493 = vunpack.c.l.b16 %v439
          %v494 = vunpack.c.l.b16 %v440
          %v495 = vunpack.c.l.b16 %v441
          %v496 = vunpack.c.l.b16 %v442
          %v497 = vunpack.c.l.b16 %v443
          %v498 = vunpack.c.l.b16 %v444
          %v499 = vunpack.c.l.b16 %v445
          %v500 = vunpack.c.l.b16 %v446
          %v501 = vpack.c.b16 %v490, %v489
          %v502 = vpack.c.b16 %v492, %v491
          %v503 = vpack.c.b16 %v494, %v493
          %v504 = vpack.c.b16 %v496, %v495
          %v505 = vpack.c.b16 %v498, %v497
          %v506 = vpack.c.b16 %v500, %v499
          %vm513 = vcmask 785408
          %v515 = vsel %vm513, %v471, 0
          %v518 = vsel %vm513, %v472, 0
          %v521 = vsel %vm513, %v473, 0
          %v524 = vsel %vm513, %v474, 0
          %v527 = vsel %vm513, %v475, 0
          %v530 = vsel %vm513, %v476, 0
          %532 = vmatprep.subr.bf16.mxu0 0
          %533 = vmatpush1.bf16.msra.mxu0 0
          %534 = vmatprep.subr.bf16.mxu0 0
          %535 = vmatpush1.bf16.msra.mxu0 0
          %536 = vmatprep.subr.bf16.mxu0 0
          %537 = vmatpush1.bf16.msra.mxu0 %v506
          %538 = vmatprep.subr.bf16.mxu0 0
          %539 = vmatpush1.bf16.msra.mxu0 %v505
          %540 = vmatprep.subr.bf16.mxu0 0
          %541 = vmatpush1.bf16.msra.mxu0 %v504
          %542 = vmatprep.subr.bf16.mxu0 0
          %543 = vmatpush1.bf16.msra.mxu0 %v503
          %544 = vmatprep.subr.bf16.mxu0 0
          %545 = vmatpush1.bf16.msra.mxu0 %v502
          %546 = vmatprep.subr.bf16.mxu0 0
          %547 = vmatpush1.bf16.msra.mxu0 %v501
          %548 = vmatprep.subr.bf16.mxu0 0
          %549 = vmatpush2.bf16.msra.mxu0 0
          %550 = vmatprep.subr.bf16.mxu0 0
          %551 = vmatpush2.bf16.msra.mxu0 0
          %552 = vmatprep.subr.bf16.mxu0 0
          %553 = vmatpush2.bf16.msra.mxu0 0
          %554 = vmatprep.subr.bf16.mxu0 0
          %555 = vmatpush2.bf16.msra.mxu0 0
          %556 = vmatprep.subr.bf16.mxu0 0
          %557 = vmatpush2.bf16.msra.mxu0 0
          %558 = vmatprep.subr.bf16.mxu0 0
          %559 = vmatpush2.bf16.msra.mxu0 0
          %560 = vmatprep.subr.bf16.mxu0 0
          %561 = vmatpush2.bf16.msra.mxu0 0
          %562 = vmatprep.subr.bf16.mxu0 0
          %563 = vmatpush2.bf16.msra.mxu0 0
          %564 = vmatprep.mubr.bf16.mxu0 0
          %565 = vmatmul.mubr.bf16.gmra.mxu0 %v515
          %v566 = vpop.f32.mrf.mxu0
          %v567 = vadd.f32 0.0, %v566
          %v568 = vpop.f32.mrf.mxu0
          %v569 = vpop.f32.mrf.mxu0
          %v570 = vadd.f32 0.0, %v569
          %v571 = vpop.f32.mrf.mxu0
          %572 = vmatprep.mubr.bf16.mxu0 0
          %573 = vmatmul.mubr.bf16.gmra.mxu0 %v518
          %v574 = vpop.f32.mrf.mxu0
          %v575 = vadd.f32 0.0, %v574
          %v576 = vpop.f32.mrf.mxu0
          %v577 = vpop.f32.mrf.mxu0
          %v578 = vadd.f32 0.0, %v577
          %v579 = vpop.f32.mrf.mxu0
          %580 = vmatprep.mubr.bf16.mxu0 0
          %581 = vmatmul.mubr.bf16.gmra.mxu0 %v521
          %v582 = vpop.f32.mrf.mxu0
          %v583 = vadd.f32 0.0, %v582
          %v584 = vpop.f32.mrf.mxu0
          %v585 = vpop.f32.mrf.mxu0
          %v586 = vadd.f32 0.0, %v585
          %v587 = vpop.f32.mrf.mxu0
          %588 = vmatprep.mubr.bf16.mxu0 0
          %589 = vmatmul.mubr.bf16.gmra.mxu0 %v524
          %v590 = vpop.f32.mrf.mxu0
          %v591 = vadd.f32 0.0, %v590
          %v592 = vpop.f32.mrf.mxu0
          %v593 = vpop.f32.mrf.mxu0
          %v594 = vadd.f32 0.0, %v593
          %v595 = vpop.f32.mrf.mxu0
          %596 = vmatprep.mubr.bf16.mxu0 0
          %597 = vmatmul.mubr.bf16.gmra.mxu0 %v527
          %v598 = vpop.f32.mrf.mxu0
          %v599 = vadd.f32 0.0, %v598
          %v600 = vpop.f32.mrf.mxu0
          %v601 = vpop.f32.mrf.mxu0
          %v602 = vadd.f32 0.0, %v601
          %v603 = vpop.f32.mrf.mxu0
          %604 = vmatprep.mubr.bf16.mxu0 0
          %605 = vmatmul.mubr.bf16.gmra.mxu0 %v530
          %v606 = vpop.f32.mrf.mxu0
          %v607 = vadd.f32 0.0, %v606
          %v608 = vpop.f32.mrf.mxu0
          %v609 = vpop.f32.mrf.mxu0
          %v610 = vadd.f32 0.0, %v609
          %v611 = vpop.f32.mrf.mxu0
          %612 = vdwg.mxu0
          %v613 = vpack.c.bf16 %v570, %v567
          %v614 = vpack.c.bf16 %v578, %v575
          %v615 = vpack.c.bf16 %v586, %v583
          %v616 = vpack.c.bf16 %v594, %v591
          %v617 = vpack.c.bf16 %v602, %v599
          %v618 = vpack.c.bf16 %v610, %v607
          %v619 = vld [vmem:[%s3] sm:$0xf]
          %v620 = vld [vmem:[%s3 + $0x4] sm:$0xf]
          %v621 = vld [vmem:[%s3 + $0x8] sm:$0xf]
          %v622 = vld [vmem:[%s3 + $0xc] sm:$0xf]
          %v623 = vld [vmem:[%s3 + $0x10] sm:$0xf]
          %v624 = vld [vmem:[%s3 + $0x14] sm:$0xf]
          %v625 = vld [vmem:[%s3 + $0x18] sm:$0xf]
          %v626 = vld [vmem:[%s3 + $0x1c] sm:$0xf]
          %v627 = vld [vmem:[%s3 + $0x20] sm:$0xf]
          %v628 = vld [vmem:[%s3 + $0x24] sm:$0xf]
          %v629 = vld [vmem:[%s3 + $0x28] sm:$0xf]
          %v630 = vld [vmem:[%s3 + $0x2c] sm:$0xf]
          %v631 = vld [vmem:[%s3 + $0x30] sm:$0xf]
          %v632 = vld [vmem:[%s3 + $0x34] sm:$0xf]
          %v633 = vld [vmem:[%s3 + $0x38] sm:$0xf]
          %v634 = vld [vmem:[%s3 + $0x3c] sm:$0xf]
          %v635 = vld [vmem:[%s4] sm:$0x1]
          %637 = vset.pattern.permute.xlu0 0
          %638 = vperm.xlu0 %637, %v402
          %v639 = vpop.permute.xlu0 %638
          %642 = vset.pattern.permute.xlu0 0
          %643 = vperm.xlu0 %642, %v403
          %v644 = vpop.permute.xlu0 %643
          %647 = vset.pattern.permute.xlu0 0
          %648 = vperm.xlu0 %647, %v404
          %v649 = vpop.permute.xlu0 %648
          %652 = vset.pattern.permute.xlu0 0
          %653 = vperm.xlu0 %652, %v405
          %v654 = vpop.permute.xlu0 %653
          %657 = vset.pattern.permute.xlu0 0
          %658 = vperm.xlu0 %657, %v406
          %v659 = vpop.permute.xlu0 %658
          %662 = vset.pattern.permute.xlu0 0
          %663 = vperm.xlu0 %662, %v407
          %v664 = vpop.permute.xlu0 %663
          %667 = vset.pattern.permute.xlu0 0
          %668 = vperm.xlu0 %667, %v408
          %v669 = vpop.permute.xlu0 %668
          %672 = vset.pattern.permute.xlu0 0
          %673 = vperm.xlu0 %672, %v409
          %v674 = vpop.permute.xlu0 %673
          %677 = vset.pattern.permute.xlu0 0
          %678 = vperm.xlu0 %677, %v410
          %v679 = vpop.permute.xlu0 %678
          %682 = vset.pattern.permute.xlu0 0
          %683 = vperm.xlu0 %682, %v411
          %v684 = vpop.permute.xlu0 %683
          %687 = vset.pattern.permute.xlu0 0
          %688 = vperm.xlu0 %687, %v412
          %v689 = vpop.permute.xlu0 %688
          %692 = vset.pattern.permute.xlu0 0
          %693 = vperm.xlu0 %692, %v413
          %v694 = vpop.permute.xlu0 %693
          %v697 = vlaneseq
          %v698 = vshrl.u32 %v697, 7
          %v699 = vsub.s32 0, %v698
          %v700 = vrot.slane %v635, %v699
          %v702 = vmul.f32 %v639, %v700
          %v703 = vmul.f32 %v644, %v700
          %v704 = vmul.f32 %v649, %v700
          %v705 = vmul.f32 %v654, %v700
          %v706 = vmul.f32 %v659, %v700
          %v707 = vmul.f32 %v664, %v700
          %v708 = vmul.f32 %v669, %v700
          %v709 = vmul.f32 %v674, %v700
          %v710 = vmul.f32 %v679, %v700
          %v711 = vmul.f32 %v684, %v700
          %v712 = vmul.f32 %v689, %v700
          %v713 = vmul.f32 %v694, %v700
          %v730 = vunpack.c.l.b16 %v619
          %v731 = vunpack.c.l.b16 %v620
          %v732 = vunpack.c.l.b16 %v621
          %v733 = vunpack.c.l.b16 %v622
          %v734 = vunpack.c.l.b16 %v623
          %v735 = vunpack.c.l.b16 %v624
          %v736 = vunpack.c.l.b16 %v625
          %v737 = vunpack.c.l.b16 %v626
          %v738 = vunpack.c.l.b16 %v627
          %v739 = vunpack.c.l.b16 %v628
          %v740 = vunpack.c.l.b16 %v629
          %v741 = vunpack.c.l.b16 %v630
          %v742 = vunpack.c.l.b16 %v631
          %v743 = vunpack.c.l.b16 %v632
          %v744 = vunpack.c.l.b16 %v633
          %v745 = vunpack.c.l.b16 %v634
          %v746 = vpack.c.b16 %v731, %v730
          %v747 = vpack.c.b16 %v733, %v732
          %v748 = vpack.c.b16 %v735, %v734
          %v749 = vpack.c.b16 %v737, %v736
          %v750 = vpack.c.b16 %v739, %v738
          %v751 = vpack.c.b16 %v741, %v740
          %v752 = vpack.c.b16 %v743, %v742
          %v753 = vpack.c.b16 %v745, %v744
          %762 = vmatprep.subr.bf16.mxu0 0
          %763 = vmatpush1.bf16.msra.mxu0 %v753
          %764 = vmatprep.subr.bf16.mxu0 0
          %765 = vmatpush1.bf16.msra.mxu0 %v752
          %766 = vmatprep.subr.bf16.mxu0 0
          %767 = vmatpush1.bf16.msra.mxu0 %v751
          %768 = vmatprep.subr.bf16.mxu0 0
          %769 = vmatpush1.bf16.msra.mxu0 %v750
          %770 = vmatprep.subr.bf16.mxu0 0
          %771 = vmatpush1.bf16.msra.mxu0 %v749
          %772 = vmatprep.subr.bf16.mxu0 0
          %773 = vmatpush1.bf16.msra.mxu0 %v748
          %774 = vmatprep.subr.bf16.mxu0 0
          %775 = vmatpush1.bf16.msra.mxu0 %v747
          %776 = vmatprep.subr.bf16.mxu0 0
          %777 = vmatpush1.bf16.msra.mxu0 %v746
          %778 = vmatprep.subr.bf16.mxu0 0
          %779 = vmatpush2.bf16.msra.mxu0 0
          %780 = vmatprep.subr.bf16.mxu0 0
          %781 = vmatpush2.bf16.msra.mxu0 0
          %782 = vmatprep.subr.bf16.mxu0 0
          %783 = vmatpush2.bf16.msra.mxu0 0
          %784 = vmatprep.subr.bf16.mxu0 0
          %785 = vmatpush2.bf16.msra.mxu0 0
          %786 = vmatprep.subr.bf16.mxu0 0
          %787 = vmatpush2.bf16.msra.mxu0 0
          %788 = vmatprep.subr.bf16.mxu0 0
          %789 = vmatpush2.bf16.msra.mxu0 0
          %790 = vmatprep.subr.bf16.mxu0 0
          %791 = vmatpush2.bf16.msra.mxu0 0
          %792 = vmatprep.subr.bf16.mxu0 0
          %793 = vmatpush2.bf16.msra.mxu0 0
          %794 = vmatprep.mubr.bf16.mxu0 0
          %795 = vmatmul.mubr.bf16.gmra.mxu0 %v613
          %v796 = vpop.f32.mrf.mxu0
          %v797 = vadd.f32 %v702, %v796
          %v798 = vpop.f32.mrf.mxu0
          %v799 = vpop.f32.mrf.mxu0
          %v800 = vadd.f32 %v703, %v799
          %v801 = vpop.f32.mrf.mxu0
          %802 = vmatprep.mubr.bf16.mxu0 0
          %803 = vmatmul.mubr.bf16.gmra.mxu0 %v614
          %v804 = vpop.f32.mrf.mxu0
          %v805 = vadd.f32 %v704, %v804
          %v806 = vpop.f32.mrf.mxu0
          %v807 = vpop.f32.mrf.mxu0
          %v808 = vadd.f32 %v705, %v807
          %v809 = vpop.f32.mrf.mxu0
          %810 = vmatprep.mubr.bf16.mxu0 0
          %811 = vmatmul.mubr.bf16.gmra.mxu0 %v615
          %v812 = vpop.f32.mrf.mxu0
          %v813 = vadd.f32 %v706, %v812
          %v814 = vpop.f32.mrf.mxu0
          %v815 = vpop.f32.mrf.mxu0
          %v816 = vadd.f32 %v707, %v815
          %v817 = vpop.f32.mrf.mxu0
          %818 = vmatprep.mubr.bf16.mxu0 0
          %819 = vmatmul.mubr.bf16.gmra.mxu0 %v616
          %v820 = vpop.f32.mrf.mxu0
          %v821 = vadd.f32 %v708, %v820
          %v822 = vpop.f32.mrf.mxu0
          %v823 = vpop.f32.mrf.mxu0
          %v824 = vadd.f32 %v709, %v823
          %v825 = vpop.f32.mrf.mxu0
          %826 = vmatprep.mubr.bf16.mxu0 0
          %827 = vmatmul.mubr.bf16.gmra.mxu0 %v617
          %v828 = vpop.f32.mrf.mxu0
          %v829 = vadd.f32 %v710, %v828
          %v830 = vpop.f32.mrf.mxu0
          %v831 = vpop.f32.mrf.mxu0
          %v832 = vadd.f32 %v711, %v831
          %v833 = vpop.f32.mrf.mxu0
          %834 = vmatprep.mubr.bf16.mxu0 0
          %835 = vmatmul.mubr.bf16.gmra.mxu0 %v618
          %v836 = vpop.f32.mrf.mxu0
          %v837 = vadd.f32 %v712, %v836
          %v838 = vpop.f32.mrf.mxu0
          %v839 = vpop.f32.mrf.mxu0
          %v840 = vadd.f32 %v713, %v839
          %v841 = vpop.f32.mrf.mxu0
          %842 = vdwg.mxu0
          %v843 = vmax.f32 %v797, 0.0
          %v844 = vmax.f32 %v800, 0.0
          %v845 = vmax.f32 %v805, 0.0
          %v846 = vmax.f32 %v808, 0.0
          %v847 = vmax.f32 %v813, 0.0
          %v848 = vmax.f32 %v816, 0.0
          %v849 = vmax.f32 %v821, 0.0
          %v850 = vmax.f32 %v824, 0.0
          %v851 = vmax.f32 %v829, 0.0
          %v852 = vmax.f32 %v832, 0.0
          %v853 = vmax.f32 %v837, 0.0
          %v854 = vmax.f32 %v840, 0.0
          %v855 = vpack.c.bf16 %v844, %v843
          %v856 = vpack.c.bf16 %v846, %v845
          %v857 = vpack.c.bf16 %v848, %v847
          %v858 = vpack.c.bf16 %v850, %v849
          %v859 = vpack.c.bf16 %v852, %v851
          %v860 = vpack.c.bf16 %v854, %v853
          %v867 = vunpack.c.l.b16 %v855
          %v868 = vunpack.c.h.b16 %v855
          %v869 = vunpack.c.l.b16 %v856
          %v870 = vunpack.c.h.b16 %v856
          %v871 = vunpack.c.l.b16 %v857
          %v872 = vunpack.c.h.b16 %v857
          %v873 = vunpack.c.l.b16 %v858
          %v874 = vunpack.c.h.b16 %v858
          %v875 = vunpack.c.l.b16 %v859
          %v876 = vunpack.c.h.b16 %v859
          %v877 = vunpack.c.l.b16 %v860
          %v878 = vunpack.c.h.b16 %v860
          %v879 = vpack.c.b16 %v867, %v867
          %v880 = vpack.c.b16 %v868, %v868
          %v881 = vpack.c.b16 %v869, %v869
          %v882 = vpack.c.b16 %v870, %v870
          %v883 = vpack.c.b16 %v871, %v871
          %v884 = vpack.c.b16 %v872, %v872
          %v885 = vpack.c.b16 %v873, %v873
          %v886 = vpack.c.b16 %v874, %v874
          %v887 = vpack.c.b16 %v875, %v875
          %v888 = vpack.c.b16 %v876, %v876
          %v889 = vpack.c.b16 %v877, %v877
          %v890 = vpack.c.b16 %v878, %v878
          %s903 = smul.addr %s386, 4
          %s904 = scalar_lea.vmem [#allocation2], %s903
          %905 = vst [vmem:[%s904] sm:$0xf] %v879
          %906 = vst [vmem:[%s904 + $0x4] sm:$0xf] %v880
          %907 = vst [vmem:[%s904 + $0x8] sm:$0xf] %v881
          %908 = vst [vmem:[%s904 + $0xc] sm:$0xf] %v882
          %909 = vst [vmem:[%s904 + $0x10] sm:$0xf] %v883
          %910 = vst [vmem:[%s904 + $0x14] sm:$0xf] %v884
          %911 = vst [vmem:[%s904 + $0x18] sm:$0xf] %v885
          %912 = vst [vmem:[%s904 + $0x1c] sm:$0xf] %v886
          %913 = vst [vmem:[%s904 + $0x20] sm:$0xf] %v887
          %914 = vst [vmem:[%s904 + $0x24] sm:$0xf] %v888
          %915 = vst [vmem:[%s904 + $0x28] sm:$0xf] %v889
          %916 = vst [vmem:[%s904 + $0x2c] sm:$0xf] %v890
          %917 = vst [vmem:[%s365] sm:$0xff] %v843
          %918 = vst [vmem:[%s365 + $0x8] sm:$0xff] %v844
          %919 = vst [vmem:[%s365 + $0x10] sm:$0xff] %v845
          %920 = vst [vmem:[%s365 + $0x18] sm:$0xff] %v846
          %921 = vst [vmem:[%s365 + $0x20] sm:$0xff] %v847
          %922 = vst [vmem:[%s365 + $0x28] sm:$0xff] %v848
          %923 = vst [vmem:[%s365 + $0x30] sm:$0xff] %v849
          %924 = vst [vmem:[%s365 + $0x38] sm:$0xff] %v850
          %925 = vst [vmem:[%s365 + $0x40] sm:$0xff] %v851
          %926 = vst [vmem:[%s365 + $0x48] sm:$0xff] %v852
          %927 = vst [vmem:[%s365 + $0x50] sm:$0xff] %v853
          %928 = vst [vmem:[%s365 + $0x58] sm:$0xff] %v854
        $region68: #{tpu_custom_call.1} parent=47 // pred_fallthru
          _
        %p929 = scmp.eq.s32.totalorder %s32, 1
        // Predicated region
        $region69: #{tpu_custom_call.1} parent=47 // pred_check
          %p930 = pneg %p929
        $region70: #{tpu_custom_call.1} parent=47 // pred_check_branch
          %932 = sbr.rel (%p930) target = $region72
        $region71: #{tpu_custom_call.1} parent=47 // pred_region
          %v933 = vld [vmem:[#allocation2] sm:$0xf]
          %v934 = vld [vmem:[#allocation2 + $0x4] sm:$0xf]
          %v935 = vld [vmem:[#allocation2 + $0x8] sm:$0xf]
          %v936 = vld [vmem:[#allocation2 + $0xc] sm:$0xf]
          %v937 = vld [vmem:[#allocation2 + $0x10] sm:$0xf]
          %v938 = vld [vmem:[#allocation2 + $0x14] sm:$0xf]
          %v939 = vld [vmem:[#allocation2 + $0x18] sm:$0xf]
          %v940 = vld [vmem:[#allocation2 + $0x1c] sm:$0xf]
          %v941 = vld [vmem:[#allocation2 + $0x20] sm:$0xf]
          %v942 = vld [vmem:[#allocation2 + $0x24] sm:$0xf]
          %v943 = vld [vmem:[#allocation2 + $0x28] sm:$0xf]
          %v944 = vld [vmem:[#allocation2 + $0x2c] sm:$0xf]
          %v957 = vunpack.c.l.b16 %v390
          %v958 = vunpack.c.l.b16 %v391
          %v959 = vunpack.c.l.b16 %v392
          %v960 = vunpack.c.l.b16 %v393
          %v961 = vunpack.c.l.b16 %v394
          %v962 = vunpack.c.l.b16 %v395
          %v963 = vunpack.c.l.b16 %v396
          %v964 = vunpack.c.l.b16 %v397
          %v965 = vunpack.c.l.b16 %v398
          %v966 = vunpack.c.l.b16 %v399
          %v967 = vunpack.c.l.b16 %v400
          %v968 = vunpack.c.l.b16 %v401
          %v969 = vpack.c.b16 %v958, %v957
          %v970 = vpack.c.b16 %v960, %v959
          %v971 = vpack.c.b16 %v962, %v961
          %v972 = vpack.c.b16 %v964, %v963
          %v973 = vpack.c.b16 %v966, %v965
          %v974 = vpack.c.b16 %v968, %v967
          %v987 = vunpack.c.l.b16 %v933
          %v988 = vunpack.c.l.b16 %v934
          %v989 = vunpack.c.l.b16 %v935
          %v990 = vunpack.c.l.b16 %v936
          %v991 = vunpack.c.l.b16 %v937
          %v992 = vunpack.c.l.b16 %v938
          %v993 = vunpack.c.l.b16 %v939
          %v994 = vunpack.c.l.b16 %v940
          %v995 = vunpack.c.l.b16 %v941
          %v996 = vunpack.c.l.b16 %v942
          %v997 = vunpack.c.l.b16 %v943
          %v998 = vunpack.c.l.b16 %v944
          %v999 = vpack.c.b16 %v988, %v987
          %v1000 = vpack.c.b16 %v990, %v989
          %v1001 = vpack.c.b16 %v992, %v991
          %v1002 = vpack.c.b16 %v994, %v993
          %v1003 = vpack.c.b16 %v996, %v995
          %v1004 = vpack.c.b16 %v998, %v997
          %vm1011 = vcmask 785408
          %v1013 = vsel %vm1011, %v969, 0
          %v1016 = vsel %vm1011, %v970, 0
          %v1019 = vsel %vm1011, %v971, 0
          %v1022 = vsel %vm1011, %v972, 0
          %v1025 = vsel %vm1011, %v973, 0
          %v1028 = vsel %vm1011, %v974, 0
          %1030 = vmatprep.subr.bf16.mxu0 0
          %1031 = vmatpush1.bf16.msra.mxu0 0
          %1032 = vmatprep.subr.bf16.mxu0 0
          %1033 = vmatpush1.bf16.msra.mxu0 0
          %1034 = vmatprep.subr.bf16.mxu0 0
          %1035 = vmatpush1.bf16.msra.mxu0 %v1004
          %1036 = vmatprep.subr.bf16.mxu0 0
          %1037 = vmatpush1.bf16.msra.mxu0 %v1003
          %1038 = vmatprep.subr.bf16.mxu0 0
          %1039 = vmatpush1.bf16.msra.mxu0 %v1002
          %1040 = vmatprep.subr.bf16.mxu0 0
          %1041 = vmatpush1.bf16.msra.mxu0 %v1001
          %1042 = vmatprep.subr.bf16.mxu0 0
          %1043 = vmatpush1.bf16.msra.mxu0 %v1000
          %1044 = vmatprep.subr.bf16.mxu0 0
          %1045 = vmatpush1.bf16.msra.mxu0 %v999
          %1046 = vmatprep.subr.bf16.mxu0 0
          %1047 = vmatpush2.bf16.msra.mxu0 0
          %1048 = vmatprep.subr.bf16.mxu0 0
          %1049 = vmatpush2.bf16.msra.mxu0 0
          %1050 = vmatprep.subr.bf16.mxu0 0
          %1051 = vmatpush2.bf16.msra.mxu0 0
          %1052 = vmatprep.subr.bf16.mxu0 0
          %1053 = vmatpush2.bf16.msra.mxu0 0
          %1054 = vmatprep.subr.bf16.mxu0 0
          %1055 = vmatpush2.bf16.msra.mxu0 0
          %1056 = vmatprep.subr.bf16.mxu0 0
          %1057 = vmatpush2.bf16.msra.mxu0 0
          %1058 = vmatprep.subr.bf16.mxu0 0
          %1059 = vmatpush2.bf16.msra.mxu0 0
          %1060 = vmatprep.subr.bf16.mxu0 0
          %1061 = vmatpush2.bf16.msra.mxu0 0
          %1062 = vmatprep.mubr.bf16.mxu0 0
          %1063 = vmatmul.mubr.bf16.gmra.mxu0 %v1013
          %v1064 = vpop.f32.mrf.mxu0
          %v1065 = vadd.f32 0.0, %v1064
          %v1066 = vpop.f32.mrf.mxu0
          %v1067 = vpop.f32.mrf.mxu0
          %v1068 = vadd.f32 0.0, %v1067
          %v1069 = vpop.f32.mrf.mxu0
          %1070 = vmatprep.mubr.bf16.mxu0 0
          %1071 = vmatmul.mubr.bf16.gmra.mxu0 %v1016
          %v1072 = vpop.f32.mrf.mxu0
          %v1073 = vadd.f32 0.0, %v1072
          %v1074 = vpop.f32.mrf.mxu0
          %v1075 = vpop.f32.mrf.mxu0
          %v1076 = vadd.f32 0.0, %v1075
          %v1077 = vpop.f32.mrf.mxu0
          %1078 = vmatprep.mubr.bf16.mxu0 0
          %1079 = vmatmul.mubr.bf16.gmra.mxu0 %v1019
          %v1080 = vpop.f32.mrf.mxu0
          %v1081 = vadd.f32 0.0, %v1080
          %v1082 = vpop.f32.mrf.mxu0
          %v1083 = vpop.f32.mrf.mxu0
          %v1084 = vadd.f32 0.0, %v1083
          %v1085 = vpop.f32.mrf.mxu0
          %1086 = vmatprep.mubr.bf16.mxu0 0
          %1087 = vmatmul.mubr.bf16.gmra.mxu0 %v1022
          %v1088 = vpop.f32.mrf.mxu0
          %v1089 = vadd.f32 0.0, %v1088
          %v1090 = vpop.f32.mrf.mxu0
          %v1091 = vpop.f32.mrf.mxu0
          %v1092 = vadd.f32 0.0, %v1091
          %v1093 = vpop.f32.mrf.mxu0
          %1094 = vmatprep.mubr.bf16.mxu0 0
          %1095 = vmatmul.mubr.bf16.gmra.mxu0 %v1025
          %v1096 = vpop.f32.mrf.mxu0
          %v1097 = vadd.f32 0.0, %v1096
          %v1098 = vpop.f32.mrf.mxu0
          %v1099 = vpop.f32.mrf.mxu0
          %v1100 = vadd.f32 0.0, %v1099
          %v1101 = vpop.f32.mrf.mxu0
          %1102 = vmatprep.mubr.bf16.mxu0 0
          %1103 = vmatmul.mubr.bf16.gmra.mxu0 %v1028
          %v1104 = vpop.f32.mrf.mxu0
          %v1105 = vadd.f32 0.0, %v1104
          %v1106 = vpop.f32.mrf.mxu0
          %v1107 = vpop.f32.mrf.mxu0
          %v1108 = vadd.f32 0.0, %v1107
          %v1109 = vpop.f32.mrf.mxu0
          %1110 = vdwg.mxu0
          %v1111 = vpack.c.bf16 %v1068, %v1065
          %v1112 = vpack.c.bf16 %v1076, %v1073
          %v1113 = vpack.c.bf16 %v1084, %v1081
          %v1114 = vpack.c.bf16 %v1092, %v1089
          %v1115 = vpack.c.bf16 %v1100, %v1097
          %v1116 = vpack.c.bf16 %v1108, %v1105
          %v1117 = vld [vmem:[#allocation8] sm:$0xf]
          %v1118 = vld [vmem:[#allocation8 + $0x4] sm:$0xf]
          %v1119 = vld [vmem:[#allocation8 + $0x8] sm:$0xf]
          %v1120 = vld [vmem:[#allocation8 + $0xc] sm:$0xf]
          %v1121 = vld [vmem:[#allocation8 + $0x10] sm:$0xf]
          %v1122 = vld [vmem:[#allocation8 + $0x14] sm:$0xf]
          %v1123 = vld [vmem:[#allocation8 + $0x18] sm:$0xf]
          %v1124 = vld [vmem:[#allocation8 + $0x1c] sm:$0xf]
          %v1125 = vld [vmem:[#allocation8 + $0x20] sm:$0xf]
          %v1126 = vld [vmem:[#allocation8 + $0x24] sm:$0xf]
          %v1127 = vld [vmem:[#allocation8 + $0x28] sm:$0xf]
          %v1128 = vld [vmem:[#allocation8 + $0x2c] sm:$0xf]
          %v1129 = vld [vmem:[#allocation8 + $0x30] sm:$0xf]
          %v1130 = vld [vmem:[#allocation8 + $0x34] sm:$0xf]
          %v1131 = vld [vmem:[#allocation8 + $0x38] sm:$0xf]
          %v1132 = vld [vmem:[#allocation8 + $0x3c] sm:$0xf]
          %v1133 = vld [vmem:[%s6] sm:$0x1]
          %1135 = vset.pattern.permute.xlu0 0
          %1136 = vperm.xlu0 %1135, %v402
          %v1137 = vpop.permute.xlu0 %1136
          %1140 = vset.pattern.permute.xlu0 0
          %1141 = vperm.xlu0 %1140, %v403
          %v1142 = vpop.permute.xlu0 %1141
          %1145 = vset.pattern.permute.xlu0 0
          %1146 = vperm.xlu0 %1145, %v404
          %v1147 = vpop.permute.xlu0 %1146
          %1150 = vset.pattern.permute.xlu0 0
          %1151 = vperm.xlu0 %1150, %v405
          %v1152 = vpop.permute.xlu0 %1151
          %1155 = vset.pattern.permute.xlu0 0
          %1156 = vperm.xlu0 %1155, %v406
          %v1157 = vpop.permute.xlu0 %1156
          %1160 = vset.pattern.permute.xlu0 0
          %1161 = vperm.xlu0 %1160, %v407
          %v1162 = vpop.permute.xlu0 %1161
          %1165 = vset.pattern.permute.xlu0 0
          %1166 = vperm.xlu0 %1165, %v408
          %v1167 = vpop.permute.xlu0 %1166
          %1170 = vset.pattern.permute.xlu0 0
          %1171 = vperm.xlu0 %1170, %v409
          %v1172 = vpop.permute.xlu0 %1171
          %1175 = vset.pattern.permute.xlu0 0
          %1176 = vperm.xlu0 %1175, %v410
          %v1177 = vpop.permute.xlu0 %1176
          %1180 = vset.pattern.permute.xlu0 0
          %1181 = vperm.xlu0 %1180, %v411
          %v1182 = vpop.permute.xlu0 %1181
          %1185 = vset.pattern.permute.xlu0 0
          %1186 = vperm.xlu0 %1185, %v412
          %v1187 = vpop.permute.xlu0 %1186
          %1190 = vset.pattern.permute.xlu0 0
          %1191 = vperm.xlu0 %1190, %v413
          %v1192 = vpop.permute.xlu0 %1191
          %v1195 = vlaneseq
          %v1196 = vshrl.u32 %v1195, 7
          %v1197 = vsub.s32 0, %v1196
          %v1198 = vrot.slane %v1133, %v1197
          %v1200 = vmul.f32 %v1137, %v1198
          %v1201 = vmul.f32 %v1142, %v1198
          %v1202 = vmul.f32 %v1147, %v1198
          %v1203 = vmul.f32 %v1152, %v1198
          %v1204 = vmul.f32 %v1157, %v1198
          %v1205 = vmul.f32 %v1162, %v1198
          %v1206 = vmul.f32 %v1167, %v1198
          %v1207 = vmul.f32 %v1172, %v1198
          %v1208 = vmul.f32 %v1177, %v1198
          %v1209 = vmul.f32 %v1182, %v1198
          %v1210 = vmul.f32 %v1187, %v1198
          %v1211 = vmul.f32 %v1192, %v1198
          %v1228 = vunpack.c.l.b16 %v1117
          %v1229 = vunpack.c.l.b16 %v1118
          %v1230 = vunpack.c.l.b16 %v1119
          %v1231 = vunpack.c.l.b16 %v1120
          %v1232 = vunpack.c.l.b16 %v1121
          %v1233 = vunpack.c.l.b16 %v1122
          %v1234 = vunpack.c.l.b16 %v1123
          %v1235 = vunpack.c.l.b16 %v1124
          %v1236 = vunpack.c.l.b16 %v1125
          %v1237 = vunpack.c.l.b16 %v1126
          %v1238 = vunpack.c.l.b16 %v1127
          %v1239 = vunpack.c.l.b16 %v1128
          %v1240 = vunpack.c.l.b16 %v1129
          %v1241 = vunpack.c.l.b16 %v1130
          %v1242 = vunpack.c.l.b16 %v1131
          %v1243 = vunpack.c.l.b16 %v1132
          %v1244 = vpack.c.b16 %v1229, %v1228
          %v1245 = vpack.c.b16 %v1231, %v1230
          %v1246 = vpack.c.b16 %v1233, %v1232
          %v1247 = vpack.c.b16 %v1235, %v1234
          %v1248 = vpack.c.b16 %v1237, %v1236
          %v1249 = vpack.c.b16 %v1239, %v1238
          %v1250 = vpack.c.b16 %v1241, %v1240
          %v1251 = vpack.c.b16 %v1243, %v1242
          %1260 = vmatprep.subr.bf16.mxu0 0
          %1261 = vmatpush1.bf16.msra.mxu0 %v1251
          %1262 = vmatprep.subr.bf16.mxu0 0
          %1263 = vmatpush1.bf16.msra.mxu0 %v1250
          %1264 = vmatprep.subr.bf16.mxu0 0
          %1265 = vmatpush1.bf16.msra.mxu0 %v1249
          %1266 = vmatprep.subr.bf16.mxu0 0
          %1267 = vmatpush1.bf16.msra.mxu0 %v1248
          %1268 = vmatprep.subr.bf16.mxu0 0
          %1269 = vmatpush1.bf16.msra.mxu0 %v1247
          %1270 = vmatprep.subr.bf16.mxu0 0
          %1271 = vmatpush1.bf16.msra.mxu0 %v1246
          %1272 = vmatprep.subr.bf16.mxu0 0
          %1273 = vmatpush1.bf16.msra.mxu0 %v1245
          %1274 = vmatprep.subr.bf16.mxu0 0
          %1275 = vmatpush1.bf16.msra.mxu0 %v1244
          %1276 = vmatprep.subr.bf16.mxu0 0
          %1277 = vmatpush2.bf16.msra.mxu0 0
          %1278 = vmatprep.subr.bf16.mxu0 0
          %1279 = vmatpush2.bf16.msra.mxu0 0
          %1280 = vmatprep.subr.bf16.mxu0 0
          %1281 = vmatpush2.bf16.msra.mxu0 0
          %1282 = vmatprep.subr.bf16.mxu0 0
          %1283 = vmatpush2.bf16.msra.mxu0 0
          %1284 = vmatprep.subr.bf16.mxu0 0
          %1285 = vmatpush2.bf16.msra.mxu0 0
          %1286 = vmatprep.subr.bf16.mxu0 0
          %1287 = vmatpush2.bf16.msra.mxu0 0
          %1288 = vmatprep.subr.bf16.mxu0 0
          %1289 = vmatpush2.bf16.msra.mxu0 0
          %1290 = vmatprep.subr.bf16.mxu0 0
          %1291 = vmatpush2.bf16.msra.mxu0 0
          %1292 = vmatprep.mubr.bf16.mxu0 0
          %1293 = vmatmul.mubr.bf16.gmra.mxu0 %v1111
          %v1294 = vpop.f32.mrf.mxu0
          %v1295 = vadd.f32 %v1200, %v1294
          %v1296 = vpop.f32.mrf.mxu0
          %v1297 = vpop.f32.mrf.mxu0
          %v1298 = vadd.f32 %v1201, %v1297
          %v1299 = vpop.f32.mrf.mxu0
          %1300 = vmatprep.mubr.bf16.mxu0 0
          %1301 = vmatmul.mubr.bf16.gmra.mxu0 %v1112
          %v1302 = vpop.f32.mrf.mxu0
          %v1303 = vadd.f32 %v1202, %v1302
          %v1304 = vpop.f32.mrf.mxu0
          %v1305 = vpop.f32.mrf.mxu0
          %v1306 = vadd.f32 %v1203, %v1305
          %v1307 = vpop.f32.mrf.mxu0
          %1308 = vmatprep.mubr.bf16.mxu0 0
          %1309 = vmatmul.mubr.bf16.gmra.mxu0 %v1113
          %v1310 = vpop.f32.mrf.mxu0
          %v1311 = vadd.f32 %v1204, %v1310
          %v1312 = vpop.f32.mrf.mxu0
          %v1313 = vpop.f32.mrf.mxu0
          %v1314 = vadd.f32 %v1205, %v1313
          %v1315 = vpop.f32.mrf.mxu0
          %1316 = vmatprep.mubr.bf16.mxu0 0
          %1317 = vmatmul.mubr.bf16.gmra.mxu0 %v1114
          %v1318 = vpop.f32.mrf.mxu0
          %v1319 = vadd.f32 %v1206, %v1318
          %v1320 = vpop.f32.mrf.mxu0
          %v1321 = vpop.f32.mrf.mxu0
          %v1322 = vadd.f32 %v1207, %v1321
          %v1323 = vpop.f32.mrf.mxu0
          %1324 = vmatprep.mubr.bf16.mxu0 0
          %1325 = vmatmul.mubr.bf16.gmra.mxu0 %v1115
          %v1326 = vpop.f32.mrf.mxu0
          %v1327 = vadd.f32 %v1208, %v1326
          %v1328 = vpop.f32.mrf.mxu0
          %v1329 = vpop.f32.mrf.mxu0
          %v1330 = vadd.f32 %v1209, %v1329
          %v1331 = vpop.f32.mrf.mxu0
          %1332 = vmatprep.mubr.bf16.mxu0 0
          %1333 = vmatmul.mubr.bf16.gmra.mxu0 %v1116
          %v1334 = vpop.f32.mrf.mxu0
          %v1335 = vadd.f32 %v1210, %v1334
          %v1336 = vpop.f32.mrf.mxu0
          %v1337 = vpop.f32.mrf.mxu0
          %v1338 = vadd.f32 %v1211, %v1337
          %v1339 = vpop.f32.mrf.mxu0
          %1340 = vdwg.mxu0
          %1341 = vst [vmem:[%s372] sm:$0xff] %v1295
          %1342 = vst [vmem:[%s372 + $0x8] sm:$0xff] %v1298
          %1343 = vst [vmem:[%s372 + $0x10] sm:$0xff] %v1303
          %1344 = vst [vmem:[%s372 + $0x18] sm:$0xff] %v1306
          %1345 = vst [vmem:[%s372 + $0x20] sm:$0xff] %v1311
          %1346 = vst [vmem:[%s372 + $0x28] sm:$0xff] %v1314
          %1347 = vst [vmem:[%s372 + $0x30] sm:$0xff] %v1319
          %1348 = vst [vmem:[%s372 + $0x38] sm:$0xff] %v1322
          %1349 = vst [vmem:[%s372 + $0x40] sm:$0xff] %v1327
          %1350 = vst [vmem:[%s372 + $0x48] sm:$0xff] %v1330
          %1351 = vst [vmem:[%s372 + $0x50] sm:$0xff] %v1335
          %1352 = vst [vmem:[%s372 + $0x58] sm:$0xff] %v1338
        $region72: #{tpu_custom_call.1} parent=47 // pred_fallthru
          _
        %s1353 = sand.u32 %s204, 1
        %s1354 = scalar_lea.sflag [#allocation5], %s1353
        %s1355 = sand.u32 %s204, 1
        %s1356 = smul.addr %s1355, 96
        %s1357 = scalar_lea.vmem [#allocation9], %s1356
        %s1358 = sand.u32 %s232, 1
        %s1359 = scalar_lea.sflag [#allocation11], %s1358
        %s1360 = sand.u32 %s232, 1
        %s1361 = smul.addr %s1360, 96
        %s1362 = scalar_lea.vmem [#allocation10], %s1361
        // Predicated region
        $region73: #{tpu_custom_call.1} parent=47 // pred_check
          %p1363 = pneg %p214
        $region74: #{tpu_custom_call.1} parent=47 // pred_check_branch
          %1365 = sbr.rel (%p1363) target = $region76
        $region75: #{tpu_custom_call.1} parent=47 // pred_region
          %s1366 = ssub.s32 1, %s32
          %s1367 = smul.u32 %s1366, %s33
          %s1368 = smul.u32 12, %s1367
          %s1370 = ssub.s32 1536, 1536
          %1371 = vsyncadd %s1354, %s1370
          %s1372 = smul.addr %s1368, 128
          %s1373 = scalar_lea.hbm %s7, %s1372
          %s1374 = sshll.u32 %s1357, 4
          %s1375 = int_to_ptr.vmem [resolvable:$true] %s1374
          %1380 = dma.vmem_to_hbm [thread:$0]  %s1375, 1536, %s1373, %s1354, 128, 128, 8
        $region76: #{tpu_custom_call.1} parent=47 // pred_fallthru
          _
        // Predicated region
        $region77: #{tpu_custom_call.1} parent=47 // pred_check
          %p1381 = pneg %p242
        $region78: #{tpu_custom_call.1} parent=47 // pred_check_branch
          %1383 = sbr.rel (%p1381) target = $region80
        $region79: #{tpu_custom_call.1} parent=47 // pred_region
          %s1384 = smul.u32 %s32, %s33
          %s1385 = smul.u32 12, %s1384
          %s1387 = ssub.s32 1536, 1536
          %1388 = vsyncadd %s1359, %s1387
          %s1389 = smul.addr %s1385, 128
          %s1390 = scalar_lea.hbm %s8, %s1389
          %s1391 = sshll.u32 %s1362, 4
          %s1392 = int_to_ptr.vmem [resolvable:$true] %s1391
          %1397 = dma.vmem_to_hbm [thread:$0]  %s1392, 1536, %s1390, %s1359, 128, 128, 8
        $region80: #{tpu_custom_call.1} parent=47 // pred_fallthru
          _
      $region48: #{tpu_custom_call.1} parent=5 // pred_fallthru
        _
      %p1398 = scmp.le.s32.totalorder 2, %s23
      // Predicated region
      $region81: #{tpu_custom_call.1} parent=5 // pred_check
        %p1399 = pneg %p1398
      $region82: #{tpu_custom_call.1} parent=5 // pred_check_branch
        %1401 = sbr.rel (%p1399) target = $region84
      $region83: #{tpu_custom_call.1} parent=5 // pred_region
        %s1402 = ssub.s32 %s23, 2
        // Predicated region
        $region85: #{tpu_custom_call.1} parent=83 // pred_check
          %p1403 = pneg %p220
        $region86: #{tpu_custom_call.1} parent=83 // pred_check_branch
          %1405 = sbr.rel (%p1403) target = $region88
        $region87: #{tpu_custom_call.1} parent=83 // pred_region
          %s1406 = sand.u32 %s205, 1
          %s1407 = scalar_lea.sflag [#allocation5], %s1406
          %s1408 = sand.u32 %s205, 1
          %s1409 = smul.addr %s1408, 96
          %s1410 = scalar_lea.vmem [#allocation9], %s1409
          %1411 = dma.done %s1407, 1536
        $region88: #{tpu_custom_call.1} parent=83 // pred_fallthru
          _
        // Predicated region
        $region89: #{tpu_custom_call.1} parent=83 // pred_check
          %p1412 = pneg %p248
        $region90: #{tpu_custom_call.1} parent=83 // pred_check_branch
          %1414 = sbr.rel (%p1412) target = $region92
        $region91: #{tpu_custom_call.1} parent=83 // pred_region
          %s1415 = sand.u32 %s233, 1
          %s1416 = scalar_lea.sflag [#allocation11], %s1415
          %s1417 = sand.u32 %s233, 1
          %s1418 = smul.addr %s1417, 96
          %s1419 = scalar_lea.vmem [#allocation10], %s1418
          %1420 = dma.done %s1416, 1536
        $region92: #{tpu_custom_call.1} parent=83 // pred_fallthru
          _
      $region84: #{tpu_custom_call.1} parent=5 // pred_fallthru
        _
    $region6: #{tpu_custom_call.1} parent=1 // loop_footer
      %s27 = sadd.s32 1, %s23
    $region7: #{tpu_custom_call.1} parent=1 // loop_footer_branch
      %22 = sbr.rel target = $region3
    $region8: #{tpu_custom_call.1} parent=1 // loop_exit
      _
    %1421 = vsyncpa [#allocation4], 1
    %s1422 = scalar_lea.sflag [#allocation4], 1
    %1423 = vsyncpa %s1422, 1
    %1424 = vsyncpa [#allocation7], 1
    %1425 = vsyncpa [#allocation5], 1
    %s1426 = scalar_lea.sflag [#allocation5], 1
    %1427 = vsyncpa %s1426, 1
    %1428 = vsyncpa [#allocation11], 1
    %s1429 = scalar_lea.sflag [#allocation11], 1
    %1430 = vsyncpa %s1429, 1

</llo_original>
